<compile_context>
chip_gen: v6e
topology: v6e:2x2x1
jax: 0.10.0
libtpu: 0.0.40
codegen_flags: <defaults>
</compile_context>

<pallas_src>
import math
import numpy as np
import jax
import jax.numpy as jnp
from jax.experimental import pallas as pl
from jax.experimental.pallas import tpu as pltpu


def _round_up(v, m):
    return (v + m - 1) // m * m


def uae_layer_dims(hidden_size, sequence_length, n_features=1):
    """Replicates the layer-size computation in UAEModel.__init__."""
    input_length = n_features * sequence_length
    dec_steps = 2 ** np.arange(
        max(np.ceil(np.log2(hidden_size)), 2), np.log2(input_length)
    )[1:]
    dec_setup = np.concatenate([[hidden_size], dec_steps.repeat(2), [input_length]])
    enc_setup = dec_setup[::-1]
    enc_pairs = [(int(a), int(b)) for a, b in enc_setup.reshape(-1, 2)]
    dec_pairs = [(int(a), int(b)) for a, b in dec_setup.reshape(-1, 2)]
    return enc_pairs, dec_pairs


def init_linear_params(key, pairs):
    """Deterministic init mimicking torch.nn.Linear default U[-1/sqrt(in), 1/sqrt(in)]."""
    params = []
    for fan_in, fan_out in pairs:
        key, kw, kb = jax.random.split(key, 3)
        bound = 1.0 / math.sqrt(fan_in)
        w = jax.random.uniform(kw, (fan_in, fan_out), jnp.float32, -bound, bound)
        b = jax.random.uniform(kb, (1, fan_out), jnp.float32, -bound, bound)
        params.append((w, b))
    return key, params


def make_uae_kernel(n_enc, n_dec):
    """Fused encoder+decoder MLP over one batch tile.

    Ref order: x, (w0, b0, ..., w{n-1}, b{n-1}) for enc then dec, rec_out, enc_out.
    Weights arrive pre-padded (lane multiples of 128) and pre-cast to bf16;
    biases are fp32.  Accumulation / bias / tanh / stores happen in fp32.
    """
    n_layers = n_enc + n_dec

    def kernel(*refs):
        x_ref = refs[0]
        layer_refs = []
        idx = 1
        for _ in range(n_layers):
            layer_refs.append((refs[idx], refs[idx + 1]))
            idx += 2
        rec_ref = refs[idx]
        enc_out_ref = refs[idx + 1]

        h = x_ref[...]  # bf16 (TB, L)
        for i, (w_ref, b_ref) in enumerate(layer_refs):
            acc = jnp.dot(h, w_ref[...], preferred_element_type=jnp.float32)
            acc = acc + b_ref[...]          # fp32 bias add (broadcast, single add)
            if i == n_enc - 1:              # encoder output: no Tanh (Sequential[:-1])
                enc_out_ref[...] = acc
            if i == n_layers - 1:           # decoder output: no Tanh
                rec_ref[...] = acc
            else:
                if i != n_enc - 1:          # Tanh between layers only
                    acc = jnp.tanh(acc)
                h = acc.astype(jnp.bfloat16)

    return kernel


def uae_forward(ts_batch, enc_params, dec_params, return_latent=False,
                batch_tile=None):
    B = ts_batch.shape[0]
    x = ts_batch.reshape(B, -1).astype(jnp.float32)
    L = x.shape[1]
    H = enc_params[-1][0].shape[1]
    n_enc, n_dec = len(enc_params), len(dec_params)

    # ---- pad output feature dims to lane multiples of 128, cast weights to bf16 ----
    layers = list(enc_params) + list(dec_params)
    padded = []
    in_pad = L  # input feature dim stays unpadded (block = full array dim)
    for (w, b) in layers:
        fin, fout = w.shape
        out_pad = _round_up(fout, 128)
        w_p = jnp.zeros((in_pad, out_pad), jnp.float32).at[:fin, :fout].set(w)
        b_p = jnp.zeros((1, out_pad), jnp.float32).at[:, :fout].set(b.reshape(1, -1))
        padded.append((w_p.astype(jnp.bfloat16), b_p))
        in_pad = out_pad
    L_pad = padded[-1][0].shape[1]          # padded reconstruction width
    H_pad = padded[n_enc - 1][0].shape[1]   # padded latent width

    # ---- batch tiling (TB multiple of 16 for bf16 activation sublanes) ----
    if batch_tile is None:
        batch_tile = 256 if B >= 256 else _round_up(B, 16)
    TB = _round_up(batch_tile, 16)
    B_pad = _round_up(B, TB)
    x_p = x if B_pad == B else jnp.pad(x, ((0, B_pad - B), (0, 0)))
    x_p = x_p.astype(jnp.bfloat16)

    inputs = [x_p]
    for w, b in padded:
        inputs += [w, b]

    in_specs = [pl.BlockSpec((TB, L), lambda i: (i, 0))]
    for w, b in padded:
        # Constant block index => weights/biases stay resident in VMEM across steps.
        in_specs.append(pl.BlockSpec(w.shape, lambda i: (0, 0)))
        in_specs.append(pl.BlockSpec(b.shape, lambda i: (0, 0)))

    out_shape = (
        jax.ShapeDtypeStruct((B_pad, L_pad), jnp.float32),
        jax.ShapeDtypeStruct((B_pad, H_pad), jnp.float32),
    )
    out_specs = (
        pl.BlockSpec((TB, L_pad), lambda i: (i, 0)),
        pl.BlockSpec((TB, H_pad), lambda i: (i, 0)),
    )

    # VMEM budget: resident weights + double-buffered activation/output blocks,
    # with headroom; capped so it also fits v7x's 64 MiB physical VMEM.
    weight_bytes = sum(int(w.size) * w.dtype.itemsize + int(b.size) * b.dtype.itemsize
                       for w, b in padded)
    act_bytes = 2 * TB * (L * 2 + L_pad * 4 + H_pad * 4)  # double-buffered blocks
    vmem_limit = int(min(max(2 * (weight_bytes + act_bytes) + (8 << 20), 16 << 20),
                         48 << 20))

    kernel = make_uae_kernel(n_enc, n_dec)
    rec_pad, enc_pad = pl.pallas_call(
        kernel,
        grid=(B_pad // TB,),
        in_specs=in_specs,
        out_specs=out_specs,
        out_shape=out_shape,
        compiler_params=pltpu.CompilerParams(
            dimension_semantics=("parallel",),
            vmem_limit_bytes=vmem_limit,
        ),
    )(*inputs)

    rec = rec_pad[:B, :L].reshape(ts_batch.shape)
    enc = enc_pad[:B, :H]
    return (rec, enc) if return_latent else rec


def uae_forward_ref(ts_batch, enc_params, dec_params):
    """Pure-JAX fp32 reference (matches the PyTorch module exactly)."""
    B = ts_batch.shape[0]
    h = ts_batch.reshape(B, -1).astype(jnp.float32)
    for i, (w, b) in enumerate(enc_params):
        h = h @ w + b
        if i < len(enc_params) - 1:
            h = jnp.tanh(h)
    enc = h
    for i, (w, b) in enumerate(dec_params):
        h = h @ w + b
        if i < len(dec_params) - 1:
            h = jnp.tanh(h)
    return h.reshape(ts_batch.shape), enc


def uae_forward_ref_bf16(ts_batch, enc_params, dec_params):
    """Pure-JAX reference with the same bf16-matmul / fp32-accumulate numerics."""
    B = ts_batch.shape[0]
    h = ts_batch.reshape(B, -1).astype(jnp.float32)

    def layer(h, w, b, act):
        y = jnp.dot(h.astype(jnp.bfloat16), w.astype(jnp.bfloat16),
                    preferred_element_type=jnp.float32) + b
        return jnp.tanh(y) if act else y

    for i, (w, b) in enumerate(enc_params):
        h = layer(h, w, b, i < len(enc_params) - 1)
    enc = h
    for i, (w, b) in enumerate(dec_params):
        h = layer(h, w, b, i < len(dec_params) - 1)
    return h.reshape(ts_batch.shape), enc


if __name__ == "__main__":
    # Small config: hidden_size=8, sequence_length=64, n_features=1, batch=256.
    # Layer dims -> enc: [(64,32),(32,16),(16,8)], dec: [(8,16),(16,32),(32,64)].
    # batch=256 with TB=128 exercises the batch-tiled grid (2 parallel steps).
    hidden_size = 8
    sequence_length = 64
    n_features = 1
    batch = 256

    enc_pairs, dec_pairs = uae_layer_dims(hidden_size, sequence_length, n_features)

    key = jax.random.PRNGKey(0)
    key, enc_params = init_linear_params(key, enc_pairs)
    key, dec_params = init_linear_params(key, dec_pairs)

    key, kx = jax.random.split(key)
    ts_batch = jax.random.normal(
        kx, (batch, sequence_length, n_features), dtype=jnp.float32
    )

    rec, enc = uae_forward(ts_batch, enc_params, dec_params,
                           return_latent=True, batch_tile=128)
    rec = jax.block_until_ready(rec)
    enc = jax.block_until_ready(enc)

    assert rec.shape == ts_batch.shape
    assert enc.shape == (batch, hidden_size)

    # Tight check vs. a reference using the same bf16/fp32-accumulate numerics.
    rec_m, enc_m = uae_forward_ref_bf16(ts_batch, enc_params, dec_params)
    np.testing.assert_allclose(np.asarray(rec), np.asarray(rec_m), rtol=2e-2, atol=2e-2)
    np.testing.assert_allclose(np.asarray(enc), np.asarray(enc_m), rtol=2e-2, atol=2e-2)

    # Loose check vs. the exact fp32 module semantics (bf16 matmul tolerance).
    rec_ref, enc_ref = uae_forward_ref(ts_batch, enc_params, dec_params)
    np.testing.assert_allclose(np.asarray(rec), np.asarray(rec_ref), rtol=5e-2, atol=5e-2)
    np.testing.assert_allclose(np.asarray(enc), np.asarray(enc_ref), rtol=5e-2, atol=5e-2)

    print("KERNEL_OK")
</pallas_src>

<mosaic_0001>
module attributes {stable_mosaic.version = 11 : i64} {
  func.func @kernel(%arg0: i32, %arg1: memref<128x64xbf16, #tpu.memory_space<vmem>>, %arg2: memref<64x128xbf16, #tpu.memory_space<vmem>>, %arg3: memref<1x128xf32, #tpu.memory_space<vmem>>, %arg4: memref<128x128xbf16, #tpu.memory_space<vmem>>, %arg5: memref<1x128xf32, #tpu.memory_space<vmem>>, %arg6: memref<128x128xbf16, #tpu.memory_space<vmem>>, %arg7: memref<1x128xf32, #tpu.memory_space<vmem>>, %arg8: memref<128x128xbf16, #tpu.memory_space<vmem>>, %arg9: memref<1x128xf32, #tpu.memory_space<vmem>>, %arg10: memref<128x128xbf16, #tpu.memory_space<vmem>>, %arg11: memref<1x128xf32, #tpu.memory_space<vmem>>, %arg12: memref<128x128xbf16, #tpu.memory_space<vmem>>, %arg13: memref<1x128xf32, #tpu.memory_space<vmem>>, %arg14: memref<128x128xf32, #tpu.memory_space<vmem>>, %arg15: memref<128x128xf32, #tpu.memory_space<vmem>>) attributes {dimension_semantics = [#tpu.dimension_semantics<parallel>], iteration_bounds = array<i64: 2>, scalar_prefetch = 0 : i64, scratch_operands = 0 : i64, tpu.core_type = #tpu.core_type<tc>, window_params = [{transform_indices = @transform_0, window_bounds = array<i64: 128, 64>}, {pipeline_mode = #tpu.pipeline_mode<synchronous>, transform_indices = @transform_1, window_bounds = array<i64: 64, 128>}, {pipeline_mode = #tpu.pipeline_mode<synchronous>, transform_indices = @transform_2, window_bounds = array<i64: 1, 128>}, {pipeline_mode = #tpu.pipeline_mode<synchronous>, transform_indices = @transform_3, window_bounds = array<i64: 128, 128>}, {pipeline_mode = #tpu.pipeline_mode<synchronous>, transform_indices = @transform_4, window_bounds = array<i64: 1, 128>}, {pipeline_mode = #tpu.pipeline_mode<synchronous>, transform_indices = @transform_5, window_bounds = array<i64: 128, 128>}, {pipeline_mode = #tpu.pipeline_mode<synchronous>, transform_indices = @transform_6, window_bounds = array<i64: 1, 128>}, {pipeline_mode = #tpu.pipeline_mode<synchronous>, transform_indices = @transform_7, window_bounds = array<i64: 128, 128>}, {pipeline_mode = #tpu.pipeline_mode<synchronous>, transform_indices = @transform_8, window_bounds = array<i64: 1, 128>}, {pipeline_mode = #tpu.pipeline_mode<synchronous>, transform_indices = @transform_9, window_bounds = array<i64: 128, 128>}, {pipeline_mode = #tpu.pipeline_mode<synchronous>, transform_indices = @transform_10, window_bounds = array<i64: 1, 128>}, {pipeline_mode = #tpu.pipeline_mode<synchronous>, transform_indices = @transform_11, window_bounds = array<i64: 128, 128>}, {pipeline_mode = #tpu.pipeline_mode<synchronous>, transform_indices = @transform_12, window_bounds = array<i64: 1, 128>}, {transform_indices = @transform_13, window_bounds = array<i64: 128, 128>}, {transform_indices = @transform_14, window_bounds = array<i64: 128, 128>}]} {
    %c0 = arith.constant 0 : index
    %c0_0 = arith.constant 0 : index
    %0 = vector.load %arg1[%c0, %c0_0] : memref<128x64xbf16, #tpu.memory_space<vmem>>, vector<128x64xbf16>
    %c0_1 = arith.constant 0 : index
    %c0_2 = arith.constant 0 : index
    %1 = vector.load %arg2[%c0_1, %c0_2] : memref<64x128xbf16, #tpu.memory_space<vmem>>, vector<64x128xbf16>
    %cst = arith.constant dense<0.000000e+00> : vector<128x128xf32>
    %2 = tpu.matmul %0, %1, %cst {dimension_numbers = #tpu.dot_dimension_numbers<[1], [0], [0], [1], [0, 0, 1, 1], [], []>} : vector<128x64xbf16>, vector<64x128xbf16>, vector<128x128xf32> -> vector<128x128xf32>
    %c0_3 = arith.constant 0 : index
    %c0_4 = arith.constant 0 : index
    %3 = vector.load %arg3[%c0_3, %c0_4] : memref<1x128xf32, #tpu.memory_space<vmem>>, vector<1x128xf32>
    %4 = vector.broadcast %3 : vector<1x128xf32> to vector<128x128xf32>
    %5 = arith.addf %2, %4 : vector<128x128xf32>
    %6 = math.tanh %5 : vector<128x128xf32>
    %7 = arith.truncf %6 : vector<128x128xf32> to vector<128x128xbf16>
    %c0_5 = arith.constant 0 : index
    %c0_6 = arith.constant 0 : index
    %8 = vector.load %arg4[%c0_5, %c0_6] : memref<128x128xbf16, #tpu.memory_space<vmem>>, vector<128x128xbf16>
    %cst_7 = arith.constant dense<0.000000e+00> : vector<128x128xf32>
    %9 = tpu.matmul %7, %8, %cst_7 {dimension_numbers = #tpu.dot_dimension_numbers<[1], [0], [0], [1], [0, 0, 1, 1], [], []>} : vector<128x128xbf16>, vector<128x128xbf16>, vector<128x128xf32> -> vector<128x128xf32>
    %c0_8 = arith.constant 0 : index
    %c0_9 = arith.constant 0 : index
    %10 = vector.load %arg5[%c0_8, %c0_9] : memref<1x128xf32, #tpu.memory_space<vmem>>, vector<1x128xf32>
    %11 = vector.broadcast %10 : vector<1x128xf32> to vector<128x128xf32>
    %12 = arith.addf %9, %11 : vector<128x128xf32>
    %13 = math.tanh %12 : vector<128x128xf32>
    %14 = arith.truncf %13 : vector<128x128xf32> to vector<128x128xbf16>
    %c0_10 = arith.constant 0 : index
    %c0_11 = arith.constant 0 : index
    %15 = vector.load %arg6[%c0_10, %c0_11] : memref<128x128xbf16, #tpu.memory_space<vmem>>, vector<128x128xbf16>
    %cst_12 = arith.constant dense<0.000000e+00> : vector<128x128xf32>
    %16 = tpu.matmul %14, %15, %cst_12 {dimension_numbers = #tpu.dot_dimension_numbers<[1], [0], [0], [1], [0, 0, 1, 1], [], []>} : vector<128x128xbf16>, vector<128x128xbf16>, vector<128x128xf32> -> vector<128x128xf32>
    %c0_13 = arith.constant 0 : index
    %c0_14 = arith.constant 0 : index
    %17 = vector.load %arg7[%c0_13, %c0_14] : memref<1x128xf32, #tpu.memory_space<vmem>>, vector<1x128xf32>
    %18 = vector.broadcast %17 : vector<1x128xf32> to vector<128x128xf32>
    %19 = arith.addf %16, %18 : vector<128x128xf32>
    %c0_15 = arith.constant 0 : index
    %c0_16 = arith.constant 0 : index
    %20 = vector.load %arg15[%c0_15, %c0_16] : memref<128x128xf32, #tpu.memory_space<vmem>>, vector<128x128xf32>
    tpu.vector_store %arg15[%c0_15, %c0_16], %19 {strides = array<i32>} : memref<128x128xf32, #tpu.memory_space<vmem>>, vector<128x128xf32>,
    %21 = arith.truncf %19 : vector<128x128xf32> to vector<128x128xbf16>
    %c0_17 = arith.constant 0 : index
    %c0_18 = arith.constant 0 : index
    %22 = vector.load %arg8[%c0_17, %c0_18] : memref<128x128xbf16, #tpu.memory_space<vmem>>, vector<128x128xbf16>
    %cst_19 = arith.constant dense<0.000000e+00> : vector<128x128xf32>
    %23 = tpu.matmul %21, %22, %cst_19 {dimension_numbers = #tpu.dot_dimension_numbers<[1], [0], [0], [1], [0, 0, 1, 1], [], []>} : vector<128x128xbf16>, vector<128x128xbf16>, vector<128x128xf32> -> vector<128x128xf32>
    %c0_20 = arith.constant 0 : index
    %c0_21 = arith.constant 0 : index
    %24 = vector.load %arg9[%c0_20, %c0_21] : memref<1x128xf32, #tpu.memory_space<vmem>>, vector<1x128xf32>
    %25 = vector.broadcast %24 : vector<1x128xf32> to vector<128x128xf32>
    %26 = arith.addf %23, %25 : vector<128x128xf32>
    %27 = math.tanh %26 : vector<128x128xf32>
    %28 = arith.truncf %27 : vector<128x128xf32> to vector<128x128xbf16>
    %c0_22 = arith.constant 0 : index
    %c0_23 = arith.constant 0 : index
    %29 = vector.load %arg10[%c0_22, %c0_23] : memref<128x128xbf16, #tpu.memory_space<vmem>>, vector<128x128xbf16>
    %cst_24 = arith.constant dense<0.000000e+00> : vector<128x128xf32>
    %30 = tpu.matmul %28, %29, %cst_24 {dimension_numbers = #tpu.dot_dimension_numbers<[1], [0], [0], [1], [0, 0, 1, 1], [], []>} : vector<128x128xbf16>, vector<128x128xbf16>, vector<128x128xf32> -> vector<128x128xf32>
    %c0_25 = arith.constant 0 : index
    %c0_26 = arith.constant 0 : index
    %31 = vector.load %arg11[%c0_25, %c0_26] : memref<1x128xf32, #tpu.memory_space<vmem>>, vector<1x128xf32>
    %32 = vector.broadcast %31 : vector<1x128xf32> to vector<128x128xf32>
    %33 = arith.addf %30, %32 : vector<128x128xf32>
    %34 = math.tanh %33 : vector<128x128xf32>
    %35 = arith.truncf %34 : vector<128x128xf32> to vector<128x128xbf16>
    %c0_27 = arith.constant 0 : index
    %c0_28 = arith.constant 0 : index
    %36 = vector.load %arg12[%c0_27, %c0_28] : memref<128x128xbf16, #tpu.memory_space<vmem>>, vector<128x128xbf16>
    %cst_29 = arith.constant dense<0.000000e+00> : vector<128x128xf32>
    %37 = tpu.matmul %35, %36, %cst_29 {dimension_numbers = #tpu.dot_dimension_numbers<[1], [0], [0], [1], [0, 0, 1, 1], [], []>} : vector<128x128xbf16>, vector<128x128xbf16>, vector<128x128xf32> -> vector<128x128xf32>
    %c0_30 = arith.constant 0 : index
    %c0_31 = arith.constant 0 : index
    %38 = vector.load %arg13[%c0_30, %c0_31] : memref<1x128xf32, #tpu.memory_space<vmem>>, vector<1x128xf32>
    %39 = vector.broadcast %38 : vector<1x128xf32> to vector<128x128xf32>
    %40 = arith.addf %37, %39 : vector<128x128xf32>
    %c0_32 = arith.constant 0 : index
    %c0_33 = arith.constant 0 : index
    %41 = vector.load %arg14[%c0_32, %c0_33] : memref<128x128xf32, #tpu.memory_space<vmem>>, vector<128x128xf32>
    tpu.vector_store %arg14[%c0_32, %c0_33], %40 {strides = array<i32>} : memref<128x128xf32, #tpu.memory_space<vmem>>, vector<128x128xf32>,
    return
  }
  func.func @transform_0(%arg0: i32) -> (i32, i32) {
    %c0_i32 = arith.constant 0 : i32
    %c0_i32_0 = arith.constant 0 : i32
    return %arg0, %c0_i32 : i32, i32
  }
  func.func @transform_1(%arg0: i32) -> (i32, i32) {
    %c0_i32 = arith.constant 0 : i32
    %c0_i32_0 = arith.constant 0 : i32
    %c0_i32_1 = arith.constant 0 : i32
    return %c0_i32, %c0_i32_0 : i32, i32
  }
  func.func @transform_2(%arg0: i32) -> (i32, i32) {
    %c0_i32 = arith.constant 0 : i32
    %c0_i32_0 = arith.constant 0 : i32
    %c0_i32_1 = arith.constant 0 : i32
    return %c0_i32, %c0_i32_0 : i32, i32
  }
  func.func @transform_3(%arg0: i32) -> (i32, i32) {
    %c0_i32 = arith.constant 0 : i32
    %c0_i32_0 = arith.constant 0 : i32
    %c0_i32_1 = arith.constant 0 : i32
    return %c0_i32, %c0_i32_0 : i32, i32
  }
  func.func @transform_4(%arg0: i32) -> (i32, i32) {
    %c0_i32 = arith.constant 0 : i32
    %c0_i32_0 = arith.constant 0 : i32
    %c0_i32_1 = arith.constant 0 : i32
    return %c0_i32, %c0_i32_0 : i32, i32
  }
  func.func @transform_5(%arg0: i32) -> (i32, i32) {
    %c0_i32 = arith.constant 0 : i32
    %c0_i32_0 = arith.constant 0 : i32
    %c0_i32_1 = arith.constant 0 : i32
    return %c0_i32, %c0_i32_0 : i32, i32
  }
  func.func @transform_6(%arg0: i32) -> (i32, i32) {
    %c0_i32 = arith.constant 0 : i32
    %c0_i32_0 = arith.constant 0 : i32
    %c0_i32_1 = arith.constant 0 : i32
    return %c0_i32, %c0_i32_0 : i32, i32
  }
  func.func @transform_7(%arg0: i32) -> (i32, i32) {
    %c0_i32 = arith.constant 0 : i32
    %c0_i32_0 = arith.constant 0 : i32
    %c0_i32_1 = arith.constant 0 : i32
    return %c0_i32, %c0_i32_0 : i32, i32
  }
  func.func @transform_8(%arg0: i32) -> (i32, i32) {
    %c0_i32 = arith.constant 0 : i32
    %c0_i32_0 = arith.constant 0 : i32
    %c0_i32_1 = arith.constant 0 : i32
    return %c0_i32, %c0_i32_0 : i32, i32
  }
  func.func @transform_9(%arg0: i32) -> (i32, i32) {
    %c0_i32 = arith.constant 0 : i32
    %c0_i32_0 = arith.constant 0 : i32
    %c0_i32_1 = arith.constant 0 : i32
    return %c0_i32, %c0_i32_0 : i32, i32
  }
  func.func @transform_10(%arg0: i32) -> (i32, i32) {
    %c0_i32 = arith.constant 0 : i32
    %c0_i32_0 = arith.constant 0 : i32
    %c0_i32_1 = arith.constant 0 : i32
    return %c0_i32, %c0_i32_0 : i32, i32
  }
  func.func @transform_11(%arg0: i32) -> (i32, i32) {
    %c0_i32 = arith.constant 0 : i32
    %c0_i32_0 = arith.constant 0 : i32
    %c0_i32_1 = arith.constant 0 : i32
    return %c0_i32, %c0_i32_0 : i32, i32
  }
  func.func @transform_12(%arg0: i32) -> (i32, i32) {
    %c0_i32 = arith.constant 0 : i32
    %c0_i32_0 = arith.constant 0 : i32
    %c0_i32_1 = arith.constant 0 : i32
    return %c0_i32, %c0_i32_0 : i32, i32
  }
  func.func @transform_13(%arg0: i32) -> (i32, i32) {
    %c0_i32 = arith.constant 0 : i32
    %c0_i32_0 = arith.constant 0 : i32
    return %arg0, %c0_i32 : i32, i32
  }
  func.func @transform_14(%arg0: i32) -> (i32, i32) {
    %c0_i32 = arith.constant 0 : i32
    %c0_i32_0 = arith.constant 0 : i32
    return %arg0, %c0_i32 : i32, i32
  }
}

</mosaic_0001>

<llo_original>
// kernel: tpu_custom_call.1
$region0: #{tpu_custom_call.1}
  #allocation0 [shape = 'u32[]', space=smem, size = 0x4, offset = 0x4, fixed_abs, tag = 'smem constant byte address 0x4 - core index']
  #allocation1 [shape = 'u32[144,128]{1,0:T(1,128)}', space=vmem, size = 0x12000, scoped, tag = 'internal scratch']
  %s0 = inlined_call_operand.vmem [shape: bf16[256,64], index: 0, kind: input, shape index: {}]
  %s1 = inlined_call_operand.hbm [shape: bf16[64,128], index: 1, kind: input, shape index: {}]
  %s2 = inlined_call_operand.vmem [shape: f32[1,128], index: 2, kind: input, shape index: {}]
  %s3 = inlined_call_operand.vmem [shape: bf16[128,128], index: 3, kind: input, shape index: {}]
  %s4 = inlined_call_operand.vmem [shape: f32[1,128], index: 4, kind: input, shape index: {}]
  %s5 = inlined_call_operand.vmem [shape: bf16[128,128], index: 5, kind: input, shape index: {}]
  %s6 = inlined_call_operand.vmem [shape: f32[1,128], index: 6, kind: input, shape index: {}]
  %s7 = inlined_call_operand.vmem [shape: bf16[128,128], index: 7, kind: input, shape index: {}]
  %s8 = inlined_call_operand.vmem [shape: f32[1,128], index: 8, kind: input, shape index: {}]
  %s9 = inlined_call_operand.hbm [shape: bf16[128,128], index: 9, kind: input, shape index: {}]
  %s10 = inlined_call_operand.vmem [shape: f32[1,128], index: 10, kind: input, shape index: {}]
  %s11 = inlined_call_operand.hbm [shape: bf16[128,128], index: 11, kind: input, shape index: {}]
  %s12 = inlined_call_operand.vmem [shape: f32[1,128], index: 12, kind: input, shape index: {}]
  %s13 = inlined_call_operand.hbm [shape: f32[256,128], index: 13, kind: output, shape index: {0}]
  %s14 = inlined_call_operand.hbm [shape: f32[256,128], index: 14, kind: output, shape index: {1}]
  %15 = xla_tuple %s13, %s14
  %s16 = sld [smem:[#allocation0]]
  $region105: #{tpu_custom_call.1} parent=0
    _
  %s18 = ssub.s32 1, %s16
  %s19 = scalar_select 0, %s18, %s16
  $region1: #{tpu_custom_call.1} parent=0
    #allocation2 [shape = 'u8[16384]{0}', space=vmem, size = 0x4000, scoped, tag = 'input window, operand 1, single buffered']
    #allocation3 [shape = 's32[2]{0}', space=sflag, size = 0x8, scoped, tag = 'scoped memory for tpu_custom_call.1']
    #allocation4 [shape = 's32[2]{0}', space=sflag, size = 0x8, scoped, tag = 'scoped memory for tpu_custom_call.1']
    #allocation5 [shape = 'u8[32768]{0}', space=vmem, size = 0x8000, scoped, tag = 'input window, operand 9, single buffered']
    #allocation6 [shape = 's32[1]{0}', space=sflag, size = 0x4, scoped, tag = 'scoped memory for tpu_custom_call.1']
    #allocation7 [shape = 'u8[32768]{0}', space=vmem, size = 0x8000, scoped, tag = 'input window, operand 11, single buffered']
    #allocation8 [shape = 'u8[131072]{0}', space=vmem, size = 0x20000, scoped, tag = 'output window, operand 0']
    #allocation9 [shape = 'u8[131072]{0}', space=vmem, size = 0x20000, scoped, tag = 'output window, operand 1']
    #allocation10 [shape = 's32[2]{0}', space=sflag, size = 0x8, scoped, tag = 'scoped memory for tpu_custom_call.1']
    %20 = vsyncpa [#allocation3], 0
    %21 = vsyncpa [#allocation6], 0
    %22 = vsyncpa [#allocation4], 0
    %s23 = scalar_lea.sflag [#allocation4], 1
    %24 = vsyncpa %s23, 0
    %25 = vsyncpa [#allocation10], 0
    %s26 = scalar_lea.sflag [#allocation10], 1
    %27 = vsyncpa %s26, 0
    loop: start=0, step=1, limit=4
    $region2: #{tpu_custom_call.1} parent=1 // loop_pre_header
      _
    $region3: #{tpu_custom_call.1} parent=1 // loop_header
      %s29 = sphi 0, %s33
      %p30 = scmp.ge.s32.totalorder %s29, 4
      %s39 = sphi 0, %s41
      %s42 = sphi 0, %s39
      %s43 = sphi 0, %s42
      %s59 = sphi 0, %s43
      %s63 = sphi 0, %s63
      %s65 = sphi 0, %s63
      %s66 = sphi 0, %s65
      %s80 = sphi 0, %s66
      %s84 = sphi 0, %s84
      %s86 = sphi 0, %s84
      %s87 = sphi 0, %s86
      %s101 = sphi 0, %s87
      %s105 = sphi 0, %s105
      %s107 = sphi 0, %s105
      %s108 = sphi 0, %s107
      %s122 = sphi 0, %s108
      %s126 = sphi 0, %s126
      %s128 = sphi 0, %s126
      %s129 = sphi 0, %s128
      %s143 = sphi 0, %s129
      %s147 = sphi 0, %s147
      %s149 = sphi 0, %s147
      %s150 = sphi 0, %s149
      %s164 = sphi 0, %s150
      %s168 = sphi 0, %s168
      %s170 = sphi 0, %s168
      %s171 = sphi 0, %s170
      %s185 = sphi 0, %s171
      %s189 = sphi 0, %s189
      %s191 = sphi 0, %s189
      %s192 = sphi 0, %s191
      %s206 = sphi 0, %s192
      %s210 = sphi 0, %s210
      %s212 = sphi 0, %s210
      %s213 = sphi 0, %s212
      %s227 = sphi 0, %s213
      %s231 = sphi 0, %s231
      %s233 = sphi 0, %s231
      %s234 = sphi 0, %s233
      %s248 = sphi 0, %s234
      %s252 = sphi 0, %s252
      %s254 = sphi 0, %s252
      %s255 = sphi 0, %s254
      %s269 = sphi 0, %s255
      %s273 = sphi 0, %s273
      %s275 = sphi 0, %s273
      %s276 = sphi 0, %s275
      %s290 = sphi 0, %s276
      %s294 = sphi 0, %s294
      %s296 = sphi 0, %s294
      %s297 = sphi 0, %s296
      %s311 = sphi 0, %s297
      %s317 = sphi 0, %s319
      %s320 = sphi 0, %s317
      %s321 = sphi 0, %s320
      %s337 = sphi 0, %s321
      %s343 = sphi 0, %s345
      %s346 = sphi 0, %s343
      %s347 = sphi 0, %s346
      %s363 = sphi 0, %s347
    $region4: #{tpu_custom_call.1} parent=1 // loop_header_branch
      %32 = sbr.rel (%p30) target = $region8
    $region5: #{tpu_custom_call.1} parent=1 // loop_body
      %s34 = ssub.s32 %s29, 1
      %s35 = ssub.s32 %s29, 2
      %s36 = sadd.s32 %s29, 1
      %s37 = ssub.s32 %s29, %s36
      %p38 = scmp.eq.s32.totalorder %s37, 0
      %s40 = sadd.s32 %s39, 1
      %s41 = scalar_select %p38, %s39, %s40
      %p44 = pneg %p38
      %p45 = scmp.eq.s32.totalorder %s29, 1
      %p46 = por %p44, %p45
      %p47 = scmp.ne.s32.totalorder %s39, %s42
      %p48 = scmp.eq.s32.totalorder %s29, 0
      %p49 = por %p47, %p48
      %p50 = scmp.ne.s32.totalorder %s39, %s42
      %p51 = scmp.eq.s32.totalorder %s34, 1
      %p52 = por %p50, %p51
      %p53 = scmp.ne.s32.totalorder %s42, %s43
      %p54 = scmp.eq.s32.totalorder %s34, 0
      %p55 = por %p53, %p54
      %p56 = scmp.ne.s32.totalorder %s42, %s43
      %p57 = scmp.eq.s32.totalorder %s35, 1
      %p58 = por %p56, %p57
      %p60 = scmp.ne.s32.totalorder %s43, %s59
      %p61 = scmp.eq.s32.totalorder %s35, 0
      %p62 = por %p60, %p61
      %s64 = sadd.s32 %s63, 1
      %p67 = scmp.eq.s32.totalorder %s29, 1
      %p68 = scmp.ne.s32.totalorder %s63, %s65
      %p69 = scmp.eq.s32.totalorder %s29, 0
      %p70 = por %p68, %p69
      %p71 = scmp.ne.s32.totalorder %s63, %s65
      %p72 = scmp.eq.s32.totalorder %s34, 1
      %p73 = por %p71, %p72
      %p74 = scmp.ne.s32.totalorder %s65, %s66
      %p75 = scmp.eq.s32.totalorder %s34, 0
      %p76 = por %p74, %p75
      %p77 = scmp.ne.s32.totalorder %s65, %s66
      %p78 = scmp.eq.s32.totalorder %s35, 1
      %p79 = por %p77, %p78
      %p81 = scmp.ne.s32.totalorder %s66, %s80
      %p82 = scmp.eq.s32.totalorder %s35, 0
      %p83 = por %p81, %p82
      %s85 = sadd.s32 %s84, 1
      %p88 = scmp.eq.s32.totalorder %s29, 1
      %p89 = scmp.ne.s32.totalorder %s84, %s86
      %p90 = scmp.eq.s32.totalorder %s29, 0
      %p91 = por %p89, %p90
      %p92 = scmp.ne.s32.totalorder %s84, %s86
      %p93 = scmp.eq.s32.totalorder %s34, 1
      %p94 = por %p92, %p93
      %p95 = scmp.ne.s32.totalorder %s86, %s87
      %p96 = scmp.eq.s32.totalorder %s34, 0
      %p97 = por %p95, %p96
      %p98 = scmp.ne.s32.totalorder %s86, %s87
      %p99 = scmp.eq.s32.totalorder %s35, 1
      %p100 = por %p98, %p99
      %p102 = scmp.ne.s32.totalorder %s87, %s101
      %p103 = scmp.eq.s32.totalorder %s35, 0
      %p104 = por %p102, %p103
      %s106 = sadd.s32 %s105, 1
      %p109 = scmp.eq.s32.totalorder %s29, 1
      %p110 = scmp.ne.s32.totalorder %s105, %s107
      %p111 = scmp.eq.s32.totalorder %s29, 0
      %p112 = por %p110, %p111
      %p113 = scmp.ne.s32.totalorder %s105, %s107
      %p114 = scmp.eq.s32.totalorder %s34, 1
      %p115 = por %p113, %p114
      %p116 = scmp.ne.s32.totalorder %s107, %s108
      %p117 = scmp.eq.s32.totalorder %s34, 0
      %p118 = por %p116, %p117
      %p119 = scmp.ne.s32.totalorder %s107, %s108
      %p120 = scmp.eq.s32.totalorder %s35, 1
      %p121 = por %p119, %p120
      %p123 = scmp.ne.s32.totalorder %s108, %s122
      %p124 = scmp.eq.s32.totalorder %s35, 0
      %p125 = por %p123, %p124
      %s127 = sadd.s32 %s126, 1
      %p130 = scmp.eq.s32.totalorder %s29, 1
      %p131 = scmp.ne.s32.totalorder %s126, %s128
      %p132 = scmp.eq.s32.totalorder %s29, 0
      %p133 = por %p131, %p132
      %p134 = scmp.ne.s32.totalorder %s126, %s128
      %p135 = scmp.eq.s32.totalorder %s34, 1
      %p136 = por %p134, %p135
      %p137 = scmp.ne.s32.totalorder %s128, %s129
      %p138 = scmp.eq.s32.totalorder %s34, 0
      %p139 = por %p137, %p138
      %p140 = scmp.ne.s32.totalorder %s128, %s129
      %p141 = scmp.eq.s32.totalorder %s35, 1
      %p142 = por %p140, %p141
      %p144 = scmp.ne.s32.totalorder %s129, %s143
      %p145 = scmp.eq.s32.totalorder %s35, 0
      %p146 = por %p144, %p145
      %s148 = sadd.s32 %s147, 1
      %p151 = scmp.eq.s32.totalorder %s29, 1
      %p152 = scmp.ne.s32.totalorder %s147, %s149
      %p153 = scmp.eq.s32.totalorder %s29, 0
      %p154 = por %p152, %p153
      %p155 = scmp.ne.s32.totalorder %s147, %s149
      %p156 = scmp.eq.s32.totalorder %s34, 1
      %p157 = por %p155, %p156
      %p158 = scmp.ne.s32.totalorder %s149, %s150
      %p159 = scmp.eq.s32.totalorder %s34, 0
      %p160 = por %p158, %p159
      %p161 = scmp.ne.s32.totalorder %s149, %s150
      %p162 = scmp.eq.s32.totalorder %s35, 1
      %p163 = por %p161, %p162
      %p165 = scmp.ne.s32.totalorder %s150, %s164
      %p166 = scmp.eq.s32.totalorder %s35, 0
      %p167 = por %p165, %p166
      %s169 = sadd.s32 %s168, 1
      %p172 = scmp.eq.s32.totalorder %s29, 1
      %p173 = scmp.ne.s32.totalorder %s168, %s170
      %p174 = scmp.eq.s32.totalorder %s29, 0
      %p175 = por %p173, %p174
      %p176 = scmp.ne.s32.totalorder %s168, %s170
      %p177 = scmp.eq.s32.totalorder %s34, 1
      %p178 = por %p176, %p177
      %p179 = scmp.ne.s32.totalorder %s170, %s171
      %p180 = scmp.eq.s32.totalorder %s34, 0
      %p181 = por %p179, %p180
      %p182 = scmp.ne.s32.totalorder %s170, %s171
      %p183 = scmp.eq.s32.totalorder %s35, 1
      %p184 = por %p182, %p183
      %p186 = scmp.ne.s32.totalorder %s171, %s185
      %p187 = scmp.eq.s32.totalorder %s35, 0
      %p188 = por %p186, %p187
      %s190 = sadd.s32 %s189, 1
      %p193 = scmp.eq.s32.totalorder %s29, 1
      %p194 = scmp.ne.s32.totalorder %s189, %s191
      %p195 = scmp.eq.s32.totalorder %s29, 0
      %p196 = por %p194, %p195
      %p197 = scmp.ne.s32.totalorder %s189, %s191
      %p198 = scmp.eq.s32.totalorder %s34, 1
      %p199 = por %p197, %p198
      %p200 = scmp.ne.s32.totalorder %s191, %s192
      %p201 = scmp.eq.s32.totalorder %s34, 0
      %p202 = por %p200, %p201
      %p203 = scmp.ne.s32.totalorder %s191, %s192
      %p204 = scmp.eq.s32.totalorder %s35, 1
      %p205 = por %p203, %p204
      %p207 = scmp.ne.s32.totalorder %s192, %s206
      %p208 = scmp.eq.s32.totalorder %s35, 0
      %p209 = por %p207, %p208
      %s211 = sadd.s32 %s210, 1
      %p214 = scmp.eq.s32.totalorder %s29, 1
      %p215 = scmp.ne.s32.totalorder %s210, %s212
      %p216 = scmp.eq.s32.totalorder %s29, 0
      %p217 = por %p215, %p216
      %p218 = scmp.ne.s32.totalorder %s210, %s212
      %p219 = scmp.eq.s32.totalorder %s34, 1
      %p220 = por %p218, %p219
      %p221 = scmp.ne.s32.totalorder %s212, %s213
      %p222 = scmp.eq.s32.totalorder %s34, 0
      %p223 = por %p221, %p222
      %p224 = scmp.ne.s32.totalorder %s212, %s213
      %p225 = scmp.eq.s32.totalorder %s35, 1
      %p226 = por %p224, %p225
      %p228 = scmp.ne.s32.totalorder %s213, %s227
      %p229 = scmp.eq.s32.totalorder %s35, 0
      %p230 = por %p228, %p229
      %s232 = sadd.s32 %s231, 1
      %p235 = scmp.eq.s32.totalorder %s29, 1
      %p236 = scmp.ne.s32.totalorder %s231, %s233
      %p237 = scmp.eq.s32.totalorder %s29, 0
      %p238 = por %p236, %p237
      %p239 = scmp.ne.s32.totalorder %s231, %s233
      %p240 = scmp.eq.s32.totalorder %s34, 1
      %p241 = por %p239, %p240
      %p242 = scmp.ne.s32.totalorder %s233, %s234
      %p243 = scmp.eq.s32.totalorder %s34, 0
      %p244 = por %p242, %p243
      %p245 = scmp.ne.s32.totalorder %s233, %s234
      %p246 = scmp.eq.s32.totalorder %s35, 1
      %p247 = por %p245, %p246
      %p249 = scmp.ne.s32.totalorder %s234, %s248
      %p250 = scmp.eq.s32.totalorder %s35, 0
      %p251 = por %p249, %p250
      %s253 = sadd.s32 %s252, 1
      %p256 = scmp.eq.s32.totalorder %s29, 1
      %p257 = scmp.ne.s32.totalorder %s252, %s254
      %p258 = scmp.eq.s32.totalorder %s29, 0
      %p259 = por %p257, %p258
      %p260 = scmp.ne.s32.totalorder %s252, %s254
      %p261 = scmp.eq.s32.totalorder %s34, 1
      %p262 = por %p260, %p261
      %p263 = scmp.ne.s32.totalorder %s254, %s255
      %p264 = scmp.eq.s32.totalorder %s34, 0
      %p265 = por %p263, %p264
      %p266 = scmp.ne.s32.totalorder %s254, %s255
      %p267 = scmp.eq.s32.totalorder %s35, 1
      %p268 = por %p266, %p267
      %p270 = scmp.ne.s32.totalorder %s255, %s269
      %p271 = scmp.eq.s32.totalorder %s35, 0
      %p272 = por %p270, %p271
      %s274 = sadd.s32 %s273, 1
      %p277 = scmp.eq.s32.totalorder %s29, 1
      %p278 = scmp.ne.s32.totalorder %s273, %s275
      %p279 = scmp.eq.s32.totalorder %s29, 0
      %p280 = por %p278, %p279
      %p281 = scmp.ne.s32.totalorder %s273, %s275
      %p282 = scmp.eq.s32.totalorder %s34, 1
      %p283 = por %p281, %p282
      %p284 = scmp.ne.s32.totalorder %s275, %s276
      %p285 = scmp.eq.s32.totalorder %s34, 0
      %p286 = por %p284, %p285
      %p287 = scmp.ne.s32.totalorder %s275, %s276
      %p288 = scmp.eq.s32.totalorder %s35, 1
      %p289 = por %p287, %p288
      %p291 = scmp.ne.s32.totalorder %s276, %s290
      %p292 = scmp.eq.s32.totalorder %s35, 0
      %p293 = por %p291, %p292
      %s295 = sadd.s32 %s294, 1
      %p298 = scmp.eq.s32.totalorder %s29, 1
      %p299 = scmp.ne.s32.totalorder %s294, %s296
      %p300 = scmp.eq.s32.totalorder %s29, 0
      %p301 = por %p299, %p300
      %p302 = scmp.ne.s32.totalorder %s294, %s296
      %p303 = scmp.eq.s32.totalorder %s34, 1
      %p304 = por %p302, %p303
      %p305 = scmp.ne.s32.totalorder %s296, %s297
      %p306 = scmp.eq.s32.totalorder %s34, 0
      %p307 = por %p305, %p306
      %p308 = scmp.ne.s32.totalorder %s296, %s297
      %p309 = scmp.eq.s32.totalorder %s35, 1
      %p310 = por %p308, %p309
      %p312 = scmp.ne.s32.totalorder %s297, %s311
      %p313 = scmp.eq.s32.totalorder %s35, 0
      %p314 = por %p312, %p313
      %s315 = ssub.s32 %s29, %s36
      %p316 = scmp.eq.s32.totalorder %s315, 0
      %s318 = sadd.s32 %s317, 1
      %s319 = scalar_select %p316, %s317, %s318
      %p322 = pneg %p316
      %p323 = scmp.eq.s32.totalorder %s29, 1
      %p324 = por %p322, %p323
      %p325 = scmp.ne.s32.totalorder %s317, %s320
      %p326 = scmp.eq.s32.totalorder %s29, 0
      %p327 = por %p325, %p326
      %p328 = scmp.ne.s32.totalorder %s317, %s320
      %p329 = scmp.eq.s32.totalorder %s34, 1
      %p330 = por %p328, %p329
      %p331 = scmp.ne.s32.totalorder %s320, %s321
      %p332 = scmp.eq.s32.totalorder %s34, 0
      %p333 = por %p331, %p332
      %p334 = scmp.ne.s32.totalorder %s320, %s321
      %p335 = scmp.eq.s32.totalorder %s35, 1
      %p336 = por %p334, %p335
      %p338 = scmp.ne.s32.totalorder %s321, %s337
      %p339 = scmp.eq.s32.totalorder %s35, 0
      %p340 = por %p338, %p339
      %s341 = ssub.s32 %s29, %s36
      %p342 = scmp.eq.s32.totalorder %s341, 0
      %s344 = sadd.s32 %s343, 1
      %s345 = scalar_select %p342, %s343, %s344
      %p348 = pneg %p342
      %p349 = scmp.eq.s32.totalorder %s29, 1
      %p350 = por %p348, %p349
      %p351 = scmp.ne.s32.totalorder %s343, %s346
      %p352 = scmp.eq.s32.totalorder %s29, 0
      %p353 = por %p351, %p352
      %p354 = scmp.ne.s32.totalorder %s343, %s346
      %p355 = scmp.eq.s32.totalorder %s34, 1
      %p356 = por %p354, %p355
      %p357 = scmp.ne.s32.totalorder %s346, %s347
      %p358 = scmp.eq.s32.totalorder %s34, 0
      %p359 = por %p357, %p358
      %p360 = scmp.ne.s32.totalorder %s346, %s347
      %p361 = scmp.eq.s32.totalorder %s35, 1
      %p362 = por %p360, %p361
      %p364 = scmp.ne.s32.totalorder %s347, %s363
      %p365 = scmp.eq.s32.totalorder %s35, 0
      %p366 = por %p364, %p365
      %p367 = scmp.le.s32.totalorder 1, %s29
      %p368 = scmp.lt.s32.totalorder %s29, 3
      %p369 = pnand %p367, %p368
      %p370 = pneg %p369
      // Predicated region
      $region9: #{tpu_custom_call.1} parent=5 // pred_check
        _
      $region10: #{tpu_custom_call.1} parent=5 // pred_check_branch
        %372 = sbr.rel (%p369) target = $region12
      $region11: #{tpu_custom_call.1} parent=5 // pred_region
        %s373 = ssub.s32 %s29, 1
        // Predicated region
        $region13: #{tpu_custom_call.1} parent=11 // pred_check
          %p374 = pneg %p76
        $region14: #{tpu_custom_call.1} parent=11 // pred_check_branch
          %376 = sbr.rel (%p374) target = $region16
        $region15: #{tpu_custom_call.1} parent=11 // pred_region
          %s378 = ssub.s32 512, 512
          %379 = vsyncadd [#allocation3], %s378
          %s380 = sshll.u32 [#allocation2], 4
          %s381 = int_to_ptr.vmem [resolvable:$true] %s380
          %386 = dma.hbm_to_vmem [thread:$0]  %s1, 512, %s381, [#allocation3], 64, 64, 4
        $region16: #{tpu_custom_call.1} parent=11 // pred_fallthru
          _
        // Predicated region
        $region17: #{tpu_custom_call.1} parent=11 // pred_check
          %p387 = pneg %p97
        $region18: #{tpu_custom_call.1} parent=11 // pred_check_branch
          %389 = sbr.rel (%p387) target = $region20
        $region19: #{tpu_custom_call.1} parent=11 // pred_region
          _
        $region20: #{tpu_custom_call.1} parent=11 // pred_fallthru
          _
        // Predicated region
        $region21: #{tpu_custom_call.1} parent=11 // pred_check
          %p390 = pneg %p118
        $region22: #{tpu_custom_call.1} parent=11 // pred_check_branch
          %392 = sbr.rel (%p390) target = $region24
        $region23: #{tpu_custom_call.1} parent=11 // pred_region
          _
        $region24: #{tpu_custom_call.1} parent=11 // pred_fallthru
          _
        // Predicated region
        $region25: #{tpu_custom_call.1} parent=11 // pred_check
          %p393 = pneg %p139
        $region26: #{tpu_custom_call.1} parent=11 // pred_check_branch
          %395 = sbr.rel (%p393) target = $region28
        $region27: #{tpu_custom_call.1} parent=11 // pred_region
          _
        $region28: #{tpu_custom_call.1} parent=11 // pred_fallthru
          _
        // Predicated region
        $region29: #{tpu_custom_call.1} parent=11 // pred_check
          %p396 = pneg %p160
        $region30: #{tpu_custom_call.1} parent=11 // pred_check_branch
          %398 = sbr.rel (%p396) target = $region32
        $region31: #{tpu_custom_call.1} parent=11 // pred_region
          _
        $region32: #{tpu_custom_call.1} parent=11 // pred_fallthru
          _
        // Predicated region
        $region33: #{tpu_custom_call.1} parent=11 // pred_check
          %p399 = pneg %p181
        $region34: #{tpu_custom_call.1} parent=11 // pred_check_branch
          %401 = sbr.rel (%p399) target = $region36
        $region35: #{tpu_custom_call.1} parent=11 // pred_region
          _
        $region36: #{tpu_custom_call.1} parent=11 // pred_fallthru
          _
        // Predicated region
        $region37: #{tpu_custom_call.1} parent=11 // pred_check
          %p402 = pneg %p202
        $region38: #{tpu_custom_call.1} parent=11 // pred_check_branch
          %404 = sbr.rel (%p402) target = $region40
        $region39: #{tpu_custom_call.1} parent=11 // pred_region
          _
        $region40: #{tpu_custom_call.1} parent=11 // pred_fallthru
          _
        // Predicated region
        $region41: #{tpu_custom_call.1} parent=11 // pred_check
          %p405 = pneg %p223
        $region42: #{tpu_custom_call.1} parent=11 // pred_check_branch
          %407 = sbr.rel (%p405) target = $region44
        $region43: #{tpu_custom_call.1} parent=11 // pred_region
          _
        $region44: #{tpu_custom_call.1} parent=11 // pred_fallthru
          _
        // Predicated region
        $region45: #{tpu_custom_call.1} parent=11 // pred_check
          %p408 = pneg %p244
        $region46: #{tpu_custom_call.1} parent=11 // pred_check_branch
          %410 = sbr.rel (%p408) target = $region48
        $region47: #{tpu_custom_call.1} parent=11 // pred_region
          %s412 = ssub.s32 1024, 1024
          %413 = vsyncadd [#allocation6], %s412
          %s414 = sshll.u32 [#allocation5], 4
          %s415 = int_to_ptr.vmem [resolvable:$true] %s414
          %420 = dma.hbm_to_vmem [thread:$0]  %s9, 1024, %s415, [#allocation6], 64, 64, 4
        $region48: #{tpu_custom_call.1} parent=11 // pred_fallthru
          _
        // Predicated region
        $region49: #{tpu_custom_call.1} parent=11 // pred_check
          %p421 = pneg %p265
        $region50: #{tpu_custom_call.1} parent=11 // pred_check_branch
          %423 = sbr.rel (%p421) target = $region52
        $region51: #{tpu_custom_call.1} parent=11 // pred_region
          _
        $region52: #{tpu_custom_call.1} parent=11 // pred_fallthru
          _
        // Predicated region
        $region53: #{tpu_custom_call.1} parent=11 // pred_check
          %p424 = pneg %p286
        $region54: #{tpu_custom_call.1} parent=11 // pred_check_branch
          %426 = sbr.rel (%p424) target = $region56
        $region55: #{tpu_custom_call.1} parent=11 // pred_region
          %s428 = ssub.s32 1024, 1024
          %429 = vsyncadd [#allocation6], %s428
          %s430 = sshll.u32 [#allocation7], 4
          %s431 = int_to_ptr.vmem [resolvable:$true] %s430
          %436 = dma.hbm_to_vmem [thread:$0]  %s11, 1024, %s431, [#allocation6], 64, 64, 4
        $region56: #{tpu_custom_call.1} parent=11 // pred_fallthru
          _
        // Predicated region
        $region57: #{tpu_custom_call.1} parent=11 // pred_check
          %p437 = pneg %p307
        $region58: #{tpu_custom_call.1} parent=11 // pred_check_branch
          %439 = sbr.rel (%p437) target = $region60
        $region59: #{tpu_custom_call.1} parent=11 // pred_region
          _
        $region60: #{tpu_custom_call.1} parent=11 // pred_fallthru
          _
      $region12: #{tpu_custom_call.1} parent=5 // pred_fallthru
        _
      %p440 = scmp.lt.s32.totalorder %s29, 2
      // Predicated region
      $region61: #{tpu_custom_call.1} parent=5 // pred_check
        %p441 = pneg %p440
      $region62: #{tpu_custom_call.1} parent=5 // pred_check_branch
        %443 = sbr.rel (%p441) target = $region64
      $region63: #{tpu_custom_call.1} parent=5 // pred_region
        // Predicated region
        $region65: #{tpu_custom_call.1} parent=63 // pred_check
          %p444 = pneg %p49
        $region66: #{tpu_custom_call.1} parent=63 // pred_check_branch
          %446 = sbr.rel (%p444) target = $region68
        $region67: #{tpu_custom_call.1} parent=63 // pred_region
          %s447 = smul.u32 16, %s29
          %p448 = scmp.lt.s32.totalorder %s447, 31
          %s449 = scalar_select %p448, %s447, 31
          %s450 = smul.addr %s449, 4
          %s451 = scalar_lea.vmem %s0, %s450
          %s452 = smul.u32 16, %s29
        $region68: #{tpu_custom_call.1} parent=63 // pred_fallthru
          _
      $region64: #{tpu_custom_call.1} parent=5 // pred_fallthru
        _
      %p453 = scmp.le.s32.totalorder 1, %s29
      %p454 = scmp.lt.s32.totalorder %s29, 3
      %p455 = pnand %p453, %p454
      %p456 = pneg %p455
      // Predicated region
      $region69: #{tpu_custom_call.1} parent=5 // pred_check
        _
      $region70: #{tpu_custom_call.1} parent=5 // pred_check_branch
        %458 = sbr.rel (%p455) target = $region72
      $region71: #{tpu_custom_call.1} parent=5 // pred_region
        %s459 = ssub.s32 %s29, 1
        // Predicated region
        $region73: #{tpu_custom_call.1} parent=71 // pred_check
          %p460 = pneg %p76
        $region74: #{tpu_custom_call.1} parent=71 // pred_check_branch
          %462 = sbr.rel (%p460) target = $region76
        $region75: #{tpu_custom_call.1} parent=71 // pred_region
          %463 = dma.done [#allocation3], 512
        $region76: #{tpu_custom_call.1} parent=71 // pred_fallthru
          _
        // Predicated region
        $region77: #{tpu_custom_call.1} parent=71 // pred_check
          %p464 = pneg %p244
        $region78: #{tpu_custom_call.1} parent=71 // pred_check_branch
          %466 = sbr.rel (%p464) target = $region80
        $region79: #{tpu_custom_call.1} parent=71 // pred_region
          %467 = dma.done [#allocation6], 1024
        $region80: #{tpu_custom_call.1} parent=71 // pred_fallthru
          _
        // Predicated region
        $region81: #{tpu_custom_call.1} parent=71 // pred_check
          %p468 = pneg %p286
        $region82: #{tpu_custom_call.1} parent=71 // pred_check_branch
          %470 = sbr.rel (%p468) target = $region84
        $region83: #{tpu_custom_call.1} parent=71 // pred_region
          %471 = dma.done [#allocation6], 1024
        $region84: #{tpu_custom_call.1} parent=71 // pred_fallthru
          _
        %s472 = smul.u32 16, %s34
        %p473 = scmp.lt.s32.totalorder %s472, 31
        %s474 = scalar_select %p473, %s472, 31
        %s475 = smul.addr %s474, 4
        %s476 = scalar_lea.vmem %s0, %s475
        %p477 = pneg %p55
        %p478 = pneg %p52
        %p479 = pneg %p76
        %p480 = pneg %p73
        %p481 = pneg %p97
        %p482 = pneg %p94
        %p483 = pneg %p118
        %p484 = pneg %p115
        %p485 = pneg %p139
        %p486 = pneg %p136
        %p487 = pneg %p160
        %p488 = pneg %p157
        %p489 = pneg %p181
        %p490 = pneg %p178
        %p491 = pneg %p202
        %p492 = pneg %p199
        %p493 = pneg %p223
        %p494 = pneg %p220
        %p495 = pneg %p244
        %p496 = pneg %p241
        %p497 = pneg %p265
        %p498 = pneg %p262
        %p499 = pneg %p286
        %p500 = pneg %p283
        %p501 = pneg %p307
        %p502 = pneg %p304
        %p503 = pneg %p333
        %p504 = pneg %p330
        %s505 = sand.u32 %s320, 1
        %s506 = scalar_lea.sflag [#allocation4], %s505
        %s507 = sand.u32 %s320, 1
        %s508 = smul.addr %s507, 128
        %s509 = scalar_lea.vmem [#allocation8], %s508
        %p510 = pneg %p359
        %p511 = pneg %p356
        %s512 = sand.u32 %s346, 1
        %s513 = scalar_lea.sflag [#allocation10], %s512
        %s514 = sand.u32 %s346, 1
        %s515 = smul.addr %s514, 128
        %s516 = scalar_lea.vmem [#allocation9], %s515
        %s517 = smul.u32 16, %s34
        %p518 = scmp.lt.s32.totalorder %s517, 31
        %s519 = scalar_select %p518, %s517, 31
        %s520 = smul.addr %s519, 4
        %s521 = scalar_lea.vmem %s0, %s520
        %s522 = smul.u32 16, %s34
        %s523 = smul.u32 16, %s34
        %s524 = smul.u32 16, %s34
        %v526 = vld [vmem:[%s521] sm:$0xf]
        %v527 = vld [vmem:[%s521 + $0x4] sm:$0xf]
        %v528 = vld [vmem:[%s521 + $0x8] sm:$0xf]
        %v529 = vld [vmem:[%s521 + $0xc] sm:$0xf]
        %v530 = vld [vmem:[%s521 + $0x10] sm:$0xf]
        %v531 = vld [vmem:[%s521 + $0x14] sm:$0xf]
        %v532 = vld [vmem:[%s521 + $0x18] sm:$0xf]
        %v533 = vld [vmem:[%s521 + $0x1c] sm:$0xf]
        %v534 = vld [vmem:[%s521 + $0x20] sm:$0xf]
        %v535 = vld [vmem:[%s521 + $0x24] sm:$0xf]
        %v536 = vld [vmem:[%s521 + $0x28] sm:$0xf]
        %v537 = vld [vmem:[%s521 + $0x2c] sm:$0xf]
        %v538 = vld [vmem:[%s521 + $0x30] sm:$0xf]
        %v539 = vld [vmem:[%s521 + $0x34] sm:$0xf]
        %v540 = vld [vmem:[%s521 + $0x38] sm:$0xf]
        %v541 = vld [vmem:[%s521 + $0x3c] sm:$0xf]
        %v542 = vld [vmem:[#allocation2] sm:$0xf]
        %v543 = vld [vmem:[#allocation2 + $0x4] sm:$0xf]
        %v544 = vld [vmem:[#allocation2 + $0x8] sm:$0xf]
        %v545 = vld [vmem:[#allocation2 + $0xc] sm:$0xf]
        %v546 = vld [vmem:[#allocation2 + $0x10] sm:$0xf]
        %v547 = vld [vmem:[#allocation2 + $0x14] sm:$0xf]
        %v548 = vld [vmem:[#allocation2 + $0x18] sm:$0xf]
        %v549 = vld [vmem:[#allocation2 + $0x1c] sm:$0xf]
        %v550 = vld [vmem:[%s2] sm:$0x1]
        %v552 = vlaneseq
        %v553 = vshrl.u32 %v552, 7
        %v554 = vsub.s32 0, %v553
        %v555 = vrot.slane %v550, %v554
        %v573 = vunpack.c.l.b16 %v526
        %v574 = vunpack.c.l.b16 %v527
        %v575 = vunpack.c.l.b16 %v528
        %v576 = vunpack.c.l.b16 %v529
        %v577 = vunpack.c.l.b16 %v530
        %v578 = vunpack.c.l.b16 %v531
        %v579 = vunpack.c.l.b16 %v532
        %v580 = vunpack.c.l.b16 %v533
        %v581 = vunpack.c.l.b16 %v534
        %v582 = vunpack.c.l.b16 %v535
        %v583 = vunpack.c.l.b16 %v536
        %v584 = vunpack.c.l.b16 %v537
        %v585 = vunpack.c.l.b16 %v538
        %v586 = vunpack.c.l.b16 %v539
        %v587 = vunpack.c.l.b16 %v540
        %v588 = vunpack.c.l.b16 %v541
        %v589 = vpack.c.b16 %v574, %v573
        %v590 = vpack.c.b16 %v576, %v575
        %v591 = vpack.c.b16 %v578, %v577
        %v592 = vpack.c.b16 %v580, %v579
        %v593 = vpack.c.b16 %v582, %v581
        %v594 = vpack.c.b16 %v584, %v583
        %v595 = vpack.c.b16 %v586, %v585
        %v596 = vpack.c.b16 %v588, %v587
        %v605 = vunpack.c.l.b16 %v542
        %v606 = vunpack.c.l.b16 %v543
        %v607 = vunpack.c.l.b16 %v544
        %v608 = vunpack.c.l.b16 %v545
        %v609 = vunpack.c.l.b16 %v546
        %v610 = vunpack.c.l.b16 %v547
        %v611 = vunpack.c.l.b16 %v548
        %v612 = vunpack.c.l.b16 %v549
        %v613 = vpack.c.b16 %v606, %v605
        %v614 = vpack.c.b16 %v608, %v607
        %v615 = vpack.c.b16 %v610, %v609
        %v616 = vpack.c.b16 %v612, %v611
        %vm621 = vcmask 523264
        %v623 = vsel %vm621, %v589, 0
        %v626 = vsel %vm621, %v590, 0
        %v629 = vsel %vm621, %v591, 0
        %v632 = vsel %vm621, %v592, 0
        %v635 = vsel %vm621, %v593, 0
        %v638 = vsel %vm621, %v594, 0
        %v641 = vsel %vm621, %v595, 0
        %v644 = vsel %vm621, %v596, 0
        %646 = vmatprep.subr.bf16.mxu0 0
        %647 = vmatpush1.bf16.msra.mxu0 0
        %648 = vmatprep.subr.bf16.mxu0 0
        %649 = vmatpush1.bf16.msra.mxu0 0
        %650 = vmatprep.subr.bf16.mxu0 0
        %651 = vmatpush1.bf16.msra.mxu0 0
        %652 = vmatprep.subr.bf16.mxu0 0
        %653 = vmatpush1.bf16.msra.mxu0 0
        %654 = vmatprep.subr.bf16.mxu0 0
        %655 = vmatpush1.bf16.msra.mxu0 %v616
        %656 = vmatprep.subr.bf16.mxu0 0
        %657 = vmatpush1.bf16.msra.mxu0 %v615
        %658 = vmatprep.subr.bf16.mxu0 0
        %659 = vmatpush1.bf16.msra.mxu0 %v614
        %660 = vmatprep.subr.bf16.mxu0 0
        %661 = vmatpush1.bf16.msra.mxu0 %v613
        %662 = vmatprep.subr.bf16.mxu0 0
        %663 = vmatpush2.bf16.msra.mxu0 0
        %664 = vmatprep.subr.bf16.mxu0 0
        %665 = vmatpush2.bf16.msra.mxu0 0
        %666 = vmatprep.subr.bf16.mxu0 0
        %667 = vmatpush2.bf16.msra.mxu0 0
        %668 = vmatprep.subr.bf16.mxu0 0
        %669 = vmatpush2.bf16.msra.mxu0 0
        %670 = vmatprep.subr.bf16.mxu0 0
        %671 = vmatpush2.bf16.msra.mxu0 0
        %672 = vmatprep.subr.bf16.mxu0 0
        %673 = vmatpush2.bf16.msra.mxu0 0
        %674 = vmatprep.subr.bf16.mxu0 0
        %675 = vmatpush2.bf16.msra.mxu0 0
        %676 = vmatprep.subr.bf16.mxu0 0
        %677 = vmatpush2.bf16.msra.mxu0 0
        %678 = vmatprep.mubr.bf16.mxu0 0
        %679 = vmatmul.mubr.bf16.gmra.mxu0 %v623
        %v680 = vpop.f32.mrf.mxu0
        %v681 = vadd.f32 %v555, %v680
        %v682 = vpop.f32.mrf.mxu0
        %v683 = vpop.f32.mrf.mxu0
        %v684 = vadd.f32 %v555, %v683
        %v685 = vpop.f32.mrf.mxu0
        %686 = vmatprep.mubr.bf16.mxu0 0
        %687 = vmatmul.mubr.bf16.gmra.mxu0 %v626
        %v688 = vpop.f32.mrf.mxu0
        %v689 = vadd.f32 %v555, %v688
        %v690 = vpop.f32.mrf.mxu0
        %v691 = vpop.f32.mrf.mxu0
        %v692 = vadd.f32 %v555, %v691
        %v693 = vpop.f32.mrf.mxu0
        %694 = vmatprep.mubr.bf16.mxu0 0
        %695 = vmatmul.mubr.bf16.gmra.mxu0 %v629
        %v696 = vpop.f32.mrf.mxu0
        %v697 = vadd.f32 %v555, %v696
        %v698 = vpop.f32.mrf.mxu0
        %v699 = vpop.f32.mrf.mxu0
        %v700 = vadd.f32 %v555, %v699
        %v701 = vpop.f32.mrf.mxu0
        %702 = vmatprep.mubr.bf16.mxu0 0
        %703 = vmatmul.mubr.bf16.gmra.mxu0 %v632
        %v704 = vpop.f32.mrf.mxu0
        %v705 = vadd.f32 %v555, %v704
        %v706 = vpop.f32.mrf.mxu0
        %v707 = vpop.f32.mrf.mxu0
        %v708 = vadd.f32 %v555, %v707
        %v709 = vpop.f32.mrf.mxu0
        %710 = vmatprep.mubr.bf16.mxu0 0
        %711 = vmatmul.mubr.bf16.gmra.mxu0 %v635
        %v712 = vpop.f32.mrf.mxu0
        %v713 = vadd.f32 %v555, %v712
        %v714 = vpop.f32.mrf.mxu0
        %v715 = vpop.f32.mrf.mxu0
        %v716 = vadd.f32 %v555, %v715
        %v717 = vpop.f32.mrf.mxu0
        %718 = vmatprep.mubr.bf16.mxu0 0
        %719 = vmatmul.mubr.bf16.gmra.mxu0 %v638
        %v720 = vpop.f32.mrf.mxu0
        %v721 = vadd.f32 %v555, %v720
        %v722 = vpop.f32.mrf.mxu0
        %v723 = vpop.f32.mrf.mxu0
        %v724 = vadd.f32 %v555, %v723
        %v725 = vpop.f32.mrf.mxu0
        %726 = vmatprep.mubr.bf16.mxu0 0
        %727 = vmatmul.mubr.bf16.gmra.mxu0 %v641
        %v728 = vpop.f32.mrf.mxu0
        %v729 = vadd.f32 %v555, %v728
        %v730 = vpop.f32.mrf.mxu0
        %v731 = vpop.f32.mrf.mxu0
        %v732 = vadd.f32 %v555, %v731
        %v733 = vpop.f32.mrf.mxu0
        %734 = vmatprep.mubr.bf16.mxu0 0
        %735 = vmatmul.mubr.bf16.gmra.mxu0 %v644
        %v736 = vpop.f32.mrf.mxu0
        %v737 = vadd.f32 %v555, %v736
        %v738 = vpop.f32.mrf.mxu0
        %v739 = vpop.f32.mrf.mxu0
        %v740 = vadd.f32 %v555, %v739
        %v741 = vpop.f32.mrf.mxu0
        %742 = vdwg.mxu0
        %v743 = vtanh.pop %v681
        %v744 = vtanh.pop %v684
        %v745 = vtanh.pop %v689
        %v746 = vtanh.pop %v692
        %v747 = vtanh.pop %v697
        %v748 = vtanh.pop %v700
        %v749 = vtanh.pop %v705
        %v750 = vtanh.pop %v708
        %v751 = vtanh.pop %v713
        %v752 = vtanh.pop %v716
        %v753 = vtanh.pop %v721
        %v754 = vtanh.pop %v724
        %v755 = vtanh.pop %v729
        %v756 = vtanh.pop %v732
        %v757 = vtanh.pop %v737
        %v758 = vtanh.pop %v740
        %v759 = vpack.c.bf16 %v744, %v743
        %v760 = vpack.c.bf16 %v746, %v745
        %v761 = vpack.c.bf16 %v748, %v747
        %v762 = vpack.c.bf16 %v750, %v749
        %v763 = vpack.c.bf16 %v752, %v751
        %v764 = vpack.c.bf16 %v754, %v753
        %v765 = vpack.c.bf16 %v756, %v755
        %v766 = vpack.c.bf16 %v758, %v757
        %v767 = vld [vmem:[%s3] sm:$0xf]
        %v768 = vld [vmem:[%s3 + $0x4] sm:$0xf]
        %v769 = vld [vmem:[%s3 + $0x8] sm:$0xf]
        %v770 = vld [vmem:[%s3 + $0xc] sm:$0xf]
        %v771 = vld [vmem:[%s3 + $0x10] sm:$0xf]
        %v772 = vld [vmem:[%s3 + $0x14] sm:$0xf]
        %v773 = vld [vmem:[%s3 + $0x18] sm:$0xf]
        %v774 = vld [vmem:[%s3 + $0x1c] sm:$0xf]
        %v775 = vld [vmem:[%s3 + $0x20] sm:$0xf]
        %v776 = vld [vmem:[%s3 + $0x24] sm:$0xf]
        %v777 = vld [vmem:[%s3 + $0x28] sm:$0xf]
        %v778 = vld [vmem:[%s3 + $0x2c] sm:$0xf]
        %v779 = vld [vmem:[%s3 + $0x30] sm:$0xf]
        %v780 = vld [vmem:[%s3 + $0x34] sm:$0xf]
        %v781 = vld [vmem:[%s3 + $0x38] sm:$0xf]
        %v782 = vld [vmem:[%s3 + $0x3c] sm:$0xf]
        %v783 = vld [vmem:[%s4] sm:$0x1]
        %v785 = vlaneseq
        %v786 = vshrl.u32 %v785, 7
        %v787 = vsub.s32 0, %v786
        %v788 = vrot.slane %v783, %v787
        %v806 = vunpack.c.l.b16 %v767
        %v807 = vunpack.c.l.b16 %v768
        %v808 = vunpack.c.l.b16 %v769
        %v809 = vunpack.c.l.b16 %v770
        %v810 = vunpack.c.l.b16 %v771
        %v811 = vunpack.c.l.b16 %v772
        %v812 = vunpack.c.l.b16 %v773
        %v813 = vunpack.c.l.b16 %v774
        %v814 = vunpack.c.l.b16 %v775
        %v815 = vunpack.c.l.b16 %v776
        %v816 = vunpack.c.l.b16 %v777
        %v817 = vunpack.c.l.b16 %v778
        %v818 = vunpack.c.l.b16 %v779
        %v819 = vunpack.c.l.b16 %v780
        %v820 = vunpack.c.l.b16 %v781
        %v821 = vunpack.c.l.b16 %v782
        %v822 = vpack.c.b16 %v807, %v806
        %v823 = vpack.c.b16 %v809, %v808
        %v824 = vpack.c.b16 %v811, %v810
        %v825 = vpack.c.b16 %v813, %v812
        %v826 = vpack.c.b16 %v815, %v814
        %v827 = vpack.c.b16 %v817, %v816
        %v828 = vpack.c.b16 %v819, %v818
        %v829 = vpack.c.b16 %v821, %v820
        %838 = vmatprep.subr.bf16.mxu0 0
        %839 = vmatpush1.bf16.msra.mxu0 %v829
        %840 = vmatprep.subr.bf16.mxu0 0
        %841 = vmatpush1.bf16.msra.mxu0 %v828
        %842 = vmatprep.subr.bf16.mxu0 0
        %843 = vmatpush1.bf16.msra.mxu0 %v827
        %844 = vmatprep.subr.bf16.mxu0 0
        %845 = vmatpush1.bf16.msra.mxu0 %v826
        %846 = vmatprep.subr.bf16.mxu0 0
        %847 = vmatpush1.bf16.msra.mxu0 %v825
        %848 = vmatprep.subr.bf16.mxu0 0
        %849 = vmatpush1.bf16.msra.mxu0 %v824
        %850 = vmatprep.subr.bf16.mxu0 0
        %851 = vmatpush1.bf16.msra.mxu0 %v823
        %852 = vmatprep.subr.bf16.mxu0 0
        %853 = vmatpush1.bf16.msra.mxu0 %v822
        %854 = vmatprep.subr.bf16.mxu0 0
        %855 = vmatpush2.bf16.msra.mxu0 0
        %856 = vmatprep.subr.bf16.mxu0 0
        %857 = vmatpush2.bf16.msra.mxu0 0
        %858 = vmatprep.subr.bf16.mxu0 0
        %859 = vmatpush2.bf16.msra.mxu0 0
        %860 = vmatprep.subr.bf16.mxu0 0
        %861 = vmatpush2.bf16.msra.mxu0 0
        %862 = vmatprep.subr.bf16.mxu0 0
        %863 = vmatpush2.bf16.msra.mxu0 0
        %864 = vmatprep.subr.bf16.mxu0 0
        %865 = vmatpush2.bf16.msra.mxu0 0
        %866 = vmatprep.subr.bf16.mxu0 0
        %867 = vmatpush2.bf16.msra.mxu0 0
        %868 = vmatprep.subr.bf16.mxu0 0
        %869 = vmatpush2.bf16.msra.mxu0 0
        %870 = vmatprep.mubr.bf16.mxu0 0
        %871 = vmatmul.mubr.bf16.gmra.mxu0 %v759
        %v872 = vpop.f32.mrf.mxu0
        %v873 = vadd.f32 %v788, %v872
        %v874 = vpop.f32.mrf.mxu0
        %v875 = vpop.f32.mrf.mxu0
        %v876 = vadd.f32 %v788, %v875
        %v877 = vpop.f32.mrf.mxu0
        %878 = vmatprep.mubr.bf16.mxu0 0
        %879 = vmatmul.mubr.bf16.gmra.mxu0 %v760
        %v880 = vpop.f32.mrf.mxu0
        %v881 = vadd.f32 %v788, %v880
        %v882 = vpop.f32.mrf.mxu0
        %v883 = vpop.f32.mrf.mxu0
        %v884 = vadd.f32 %v788, %v883
        %v885 = vpop.f32.mrf.mxu0
        %886 = vmatprep.mubr.bf16.mxu0 0
        %887 = vmatmul.mubr.bf16.gmra.mxu0 %v761
        %v888 = vpop.f32.mrf.mxu0
        %v889 = vadd.f32 %v788, %v888
        %v890 = vpop.f32.mrf.mxu0
        %v891 = vpop.f32.mrf.mxu0
        %v892 = vadd.f32 %v788, %v891
        %v893 = vpop.f32.mrf.mxu0
        %894 = vmatprep.mubr.bf16.mxu0 0
        %895 = vmatmul.mubr.bf16.gmra.mxu0 %v762
        %v896 = vpop.f32.mrf.mxu0
        %v897 = vadd.f32 %v788, %v896
        %v898 = vpop.f32.mrf.mxu0
        %v899 = vpop.f32.mrf.mxu0
        %v900 = vadd.f32 %v788, %v899
        %v901 = vpop.f32.mrf.mxu0
        %902 = vmatprep.mubr.bf16.mxu0 0
        %903 = vmatmul.mubr.bf16.gmra.mxu0 %v763
        %v904 = vpop.f32.mrf.mxu0
        %v905 = vadd.f32 %v788, %v904
        %v906 = vpop.f32.mrf.mxu0
        %v907 = vpop.f32.mrf.mxu0
        %v908 = vadd.f32 %v788, %v907
        %v909 = vpop.f32.mrf.mxu0
        %910 = vmatprep.mubr.bf16.mxu0 0
        %911 = vmatmul.mubr.bf16.gmra.mxu0 %v764
        %v912 = vpop.f32.mrf.mxu0
        %v913 = vadd.f32 %v788, %v912
        %v914 = vpop.f32.mrf.mxu0
        %v915 = vpop.f32.mrf.mxu0
        %v916 = vadd.f32 %v788, %v915
        %v917 = vpop.f32.mrf.mxu0
        %918 = vmatprep.mubr.bf16.mxu0 0
        %919 = vmatmul.mubr.bf16.gmra.mxu0 %v765
        %v920 = vpop.f32.mrf.mxu0
        %v921 = vadd.f32 %v788, %v920
        %v922 = vpop.f32.mrf.mxu0
        %v923 = vpop.f32.mrf.mxu0
        %v924 = vadd.f32 %v788, %v923
        %v925 = vpop.f32.mrf.mxu0
        %926 = vmatprep.mubr.bf16.mxu0 0
        %927 = vmatmul.mubr.bf16.gmra.mxu0 %v766
        %v928 = vpop.f32.mrf.mxu0
        %v929 = vadd.f32 %v788, %v928
        %v930 = vpop.f32.mrf.mxu0
        %v931 = vpop.f32.mrf.mxu0
        %v932 = vadd.f32 %v788, %v931
        %v933 = vpop.f32.mrf.mxu0
        %934 = vdwg.mxu0
        %v935 = vtanh.pop %v873
        %v936 = vtanh.pop %v876
        %v937 = vtanh.pop %v881
        %v938 = vtanh.pop %v884
        %v939 = vtanh.pop %v889
        %v940 = vtanh.pop %v892
        %v941 = vtanh.pop %v897
        %v942 = vtanh.pop %v900
        %v943 = vtanh.pop %v905
        %v944 = vtanh.pop %v908
        %v945 = vtanh.pop %v913
        %v946 = vtanh.pop %v916
        %v947 = vtanh.pop %v921
        %v948 = vtanh.pop %v924
        %v949 = vtanh.pop %v929
        %v950 = vtanh.pop %v932
        %v951 = vpack.c.bf16 %v936, %v935
        %v952 = vpack.c.bf16 %v938, %v937
        %v953 = vpack.c.bf16 %v940, %v939
        %v954 = vpack.c.bf16 %v942, %v941
        %v955 = vpack.c.bf16 %v944, %v943
        %v956 = vpack.c.bf16 %v946, %v945
        %v957 = vpack.c.bf16 %v948, %v947
        %v958 = vpack.c.bf16 %v950, %v949
        %v959 = vld [vmem:[%s5] sm:$0xf]
        %v960 = vld [vmem:[%s5 + $0x4] sm:$0xf]
        %v961 = vld [vmem:[%s5 + $0x8] sm:$0xf]
        %v962 = vld [vmem:[%s5 + $0xc] sm:$0xf]
        %v963 = vld [vmem:[%s5 + $0x10] sm:$0xf]
        %v964 = vld [vmem:[%s5 + $0x14] sm:$0xf]
        %v965 = vld [vmem:[%s5 + $0x18] sm:$0xf]
        %v966 = vld [vmem:[%s5 + $0x1c] sm:$0xf]
        %v967 = vld [vmem:[%s5 + $0x20] sm:$0xf]
        %v968 = vld [vmem:[%s5 + $0x24] sm:$0xf]
        %v969 = vld [vmem:[%s5 + $0x28] sm:$0xf]
        %v970 = vld [vmem:[%s5 + $0x2c] sm:$0xf]
        %v971 = vld [vmem:[%s5 + $0x30] sm:$0xf]
        %v972 = vld [vmem:[%s5 + $0x34] sm:$0xf]
        %v973 = vld [vmem:[%s5 + $0x38] sm:$0xf]
        %v974 = vld [vmem:[%s5 + $0x3c] sm:$0xf]
        %v975 = vld [vmem:[%s6] sm:$0x1]
        %v977 = vlaneseq
        %v978 = vshrl.u32 %v977, 7
        %v979 = vsub.s32 0, %v978
        %v980 = vrot.slane %v975, %v979
        %v998 = vunpack.c.l.b16 %v959
        %v999 = vunpack.c.l.b16 %v960
        %v1000 = vunpack.c.l.b16 %v961
        %v1001 = vunpack.c.l.b16 %v962
        %v1002 = vunpack.c.l.b16 %v963
        %v1003 = vunpack.c.l.b16 %v964
        %v1004 = vunpack.c.l.b16 %v965
        %v1005 = vunpack.c.l.b16 %v966
        %v1006 = vunpack.c.l.b16 %v967
        %v1007 = vunpack.c.l.b16 %v968
        %v1008 = vunpack.c.l.b16 %v969
        %v1009 = vunpack.c.l.b16 %v970
        %v1010 = vunpack.c.l.b16 %v971
        %v1011 = vunpack.c.l.b16 %v972
        %v1012 = vunpack.c.l.b16 %v973
        %v1013 = vunpack.c.l.b16 %v974
        %v1014 = vpack.c.b16 %v999, %v998
        %v1015 = vpack.c.b16 %v1001, %v1000
        %v1016 = vpack.c.b16 %v1003, %v1002
        %v1017 = vpack.c.b16 %v1005, %v1004
        %v1018 = vpack.c.b16 %v1007, %v1006
        %v1019 = vpack.c.b16 %v1009, %v1008
        %v1020 = vpack.c.b16 %v1011, %v1010
        %v1021 = vpack.c.b16 %v1013, %v1012
        %1030 = vmatprep.subr.bf16.mxu0 0
        %1031 = vmatpush1.bf16.msra.mxu0 %v1021
        %1032 = vmatprep.subr.bf16.mxu0 0
        %1033 = vmatpush1.bf16.msra.mxu0 %v1020
        %1034 = vmatprep.subr.bf16.mxu0 0
        %1035 = vmatpush1.bf16.msra.mxu0 %v1019
        %1036 = vmatprep.subr.bf16.mxu0 0
        %1037 = vmatpush1.bf16.msra.mxu0 %v1018
        %1038 = vmatprep.subr.bf16.mxu0 0
        %1039 = vmatpush1.bf16.msra.mxu0 %v1017
        %1040 = vmatprep.subr.bf16.mxu0 0
        %1041 = vmatpush1.bf16.msra.mxu0 %v1016
        %1042 = vmatprep.subr.bf16.mxu0 0
        %1043 = vmatpush1.bf16.msra.mxu0 %v1015
        %1044 = vmatprep.subr.bf16.mxu0 0
        %1045 = vmatpush1.bf16.msra.mxu0 %v1014
        %1046 = vmatprep.subr.bf16.mxu0 0
        %1047 = vmatpush2.bf16.msra.mxu0 0
        %1048 = vmatprep.subr.bf16.mxu0 0
        %1049 = vmatpush2.bf16.msra.mxu0 0
        %1050 = vmatprep.subr.bf16.mxu0 0
        %1051 = vmatpush2.bf16.msra.mxu0 0
        %1052 = vmatprep.subr.bf16.mxu0 0
        %1053 = vmatpush2.bf16.msra.mxu0 0
        %1054 = vmatprep.subr.bf16.mxu0 0
        %1055 = vmatpush2.bf16.msra.mxu0 0
        %1056 = vmatprep.subr.bf16.mxu0 0
        %1057 = vmatpush2.bf16.msra.mxu0 0
        %1058 = vmatprep.subr.bf16.mxu0 0
        %1059 = vmatpush2.bf16.msra.mxu0 0
        %1060 = vmatprep.subr.bf16.mxu0 0
        %1061 = vmatpush2.bf16.msra.mxu0 0
        %1062 = vmatprep.mubr.bf16.mxu0 0
        %1063 = vmatmul.mubr.bf16.gmra.mxu0 %v951
        %v1064 = vpop.f32.mrf.mxu0
        %v1065 = vadd.f32 %v980, %v1064
        %v1066 = vpop.f32.mrf.mxu0
        %v1067 = vpop.f32.mrf.mxu0
        %v1068 = vadd.f32 %v980, %v1067
        %v1069 = vpop.f32.mrf.mxu0
        %1070 = vmatprep.mubr.bf16.mxu0 0
        %1071 = vmatmul.mubr.bf16.gmra.mxu0 %v952
        %v1072 = vpop.f32.mrf.mxu0
        %v1073 = vadd.f32 %v980, %v1072
        %v1074 = vpop.f32.mrf.mxu0
        %v1075 = vpop.f32.mrf.mxu0
        %v1076 = vadd.f32 %v980, %v1075
        %v1077 = vpop.f32.mrf.mxu0
        %1078 = vmatprep.mubr.bf16.mxu0 0
        %1079 = vmatmul.mubr.bf16.gmra.mxu0 %v953
        %v1080 = vpop.f32.mrf.mxu0
        %v1081 = vadd.f32 %v980, %v1080
        %v1082 = vpop.f32.mrf.mxu0
        %v1083 = vpop.f32.mrf.mxu0
        %v1084 = vadd.f32 %v980, %v1083
        %v1085 = vpop.f32.mrf.mxu0
        %1086 = vmatprep.mubr.bf16.mxu0 0
        %1087 = vmatmul.mubr.bf16.gmra.mxu0 %v954
        %v1088 = vpop.f32.mrf.mxu0
        %v1089 = vadd.f32 %v980, %v1088
        %v1090 = vpop.f32.mrf.mxu0
        %v1091 = vpop.f32.mrf.mxu0
        %v1092 = vadd.f32 %v980, %v1091
        %v1093 = vpop.f32.mrf.mxu0
        %1094 = vmatprep.mubr.bf16.mxu0 0
        %1095 = vmatmul.mubr.bf16.gmra.mxu0 %v955
        %v1096 = vpop.f32.mrf.mxu0
        %v1097 = vadd.f32 %v980, %v1096
        %v1098 = vpop.f32.mrf.mxu0
        %v1099 = vpop.f32.mrf.mxu0
        %v1100 = vadd.f32 %v980, %v1099
        %v1101 = vpop.f32.mrf.mxu0
        %1102 = vmatprep.mubr.bf16.mxu0 0
        %1103 = vmatmul.mubr.bf16.gmra.mxu0 %v956
        %v1104 = vpop.f32.mrf.mxu0
        %v1105 = vadd.f32 %v980, %v1104
        %v1106 = vpop.f32.mrf.mxu0
        %v1107 = vpop.f32.mrf.mxu0
        %v1108 = vadd.f32 %v980, %v1107
        %v1109 = vpop.f32.mrf.mxu0
        %1110 = vmatprep.mubr.bf16.mxu0 0
        %1111 = vmatmul.mubr.bf16.gmra.mxu0 %v957
        %v1112 = vpop.f32.mrf.mxu0
        %v1113 = vadd.f32 %v980, %v1112
        %v1114 = vpop.f32.mrf.mxu0
        %v1115 = vpop.f32.mrf.mxu0
        %v1116 = vadd.f32 %v980, %v1115
        %v1117 = vpop.f32.mrf.mxu0
        %1118 = vmatprep.mubr.bf16.mxu0 0
        %1119 = vmatmul.mubr.bf16.gmra.mxu0 %v958
        %v1120 = vpop.f32.mrf.mxu0
        %v1121 = vadd.f32 %v980, %v1120
        %v1122 = vpop.f32.mrf.mxu0
        %v1123 = vpop.f32.mrf.mxu0
        %v1124 = vadd.f32 %v980, %v1123
        %v1125 = vpop.f32.mrf.mxu0
        %1126 = vdwg.mxu0
        %1127 = vst [vmem:[%s516] sm:$0xff] %v1065
        %1128 = vst [vmem:[%s516 + $0x8] sm:$0xff] %v1068
        %1129 = vst [vmem:[%s516 + $0x10] sm:$0xff] %v1073
        %1130 = vst [vmem:[%s516 + $0x18] sm:$0xff] %v1076
        %1131 = vst [vmem:[%s516 + $0x20] sm:$0xff] %v1081
        %1132 = vst [vmem:[%s516 + $0x28] sm:$0xff] %v1084
        %1133 = vst [vmem:[%s516 + $0x30] sm:$0xff] %v1089
        %1134 = vst [vmem:[%s516 + $0x38] sm:$0xff] %v1092
        %1135 = vst [vmem:[%s516 + $0x40] sm:$0xff] %v1097
        %1136 = vst [vmem:[%s516 + $0x48] sm:$0xff] %v1100
        %1137 = vst [vmem:[%s516 + $0x50] sm:$0xff] %v1105
        %1138 = vst [vmem:[%s516 + $0x58] sm:$0xff] %v1108
        %1139 = vst [vmem:[%s516 + $0x60] sm:$0xff] %v1113
        %1140 = vst [vmem:[%s516 + $0x68] sm:$0xff] %v1116
        %1141 = vst [vmem:[%s516 + $0x70] sm:$0xff] %v1121
        %1142 = vst [vmem:[%s516 + $0x78] sm:$0xff] %v1124
        %v1143 = vpack.c.bf16 %v1068, %v1065
        %v1144 = vpack.c.bf16 %v1076, %v1073
        %v1145 = vpack.c.bf16 %v1084, %v1081
        %v1146 = vpack.c.bf16 %v1092, %v1089
        %v1147 = vpack.c.bf16 %v1100, %v1097
        %v1148 = vpack.c.bf16 %v1108, %v1105
        %v1149 = vpack.c.bf16 %v1116, %v1113
        %v1150 = vpack.c.bf16 %v1124, %v1121
        %v1151 = vld [vmem:[%s7] sm:$0xf]
        %v1152 = vld [vmem:[%s7 + $0x4] sm:$0xf]
        %v1153 = vld [vmem:[%s7 + $0x8] sm:$0xf]
        %v1154 = vld [vmem:[%s7 + $0xc] sm:$0xf]
        %v1155 = vld [vmem:[%s7 + $0x10] sm:$0xf]
        %v1156 = vld [vmem:[%s7 + $0x14] sm:$0xf]
        %v1157 = vld [vmem:[%s7 + $0x18] sm:$0xf]
        %v1158 = vld [vmem:[%s7 + $0x1c] sm:$0xf]
        %v1159 = vld [vmem:[%s7 + $0x20] sm:$0xf]
        %v1160 = vld [vmem:[%s7 + $0x24] sm:$0xf]
        %v1161 = vld [vmem:[%s7 + $0x28] sm:$0xf]
        %v1162 = vld [vmem:[%s7 + $0x2c] sm:$0xf]
        %v1163 = vld [vmem:[%s7 + $0x30] sm:$0xf]
        %v1164 = vld [vmem:[%s7 + $0x34] sm:$0xf]
        %v1165 = vld [vmem:[%s7 + $0x38] sm:$0xf]
        %v1166 = vld [vmem:[%s7 + $0x3c] sm:$0xf]
        %v1167 = vld [vmem:[%s8] sm:$0x1]
        %v1169 = vlaneseq
        %v1170 = vshrl.u32 %v1169, 7
        %v1171 = vsub.s32 0, %v1170
        %v1172 = vrot.slane %v1167, %v1171
        %v1190 = vunpack.c.l.b16 %v1151
        %v1191 = vunpack.c.l.b16 %v1152
        %v1192 = vunpack.c.l.b16 %v1153
        %v1193 = vunpack.c.l.b16 %v1154
        %v1194 = vunpack.c.l.b16 %v1155
        %v1195 = vunpack.c.l.b16 %v1156
        %v1196 = vunpack.c.l.b16 %v1157
        %v1197 = vunpack.c.l.b16 %v1158
        %v1198 = vunpack.c.l.b16 %v1159
        %v1199 = vunpack.c.l.b16 %v1160
        %v1200 = vunpack.c.l.b16 %v1161
        %v1201 = vunpack.c.l.b16 %v1162
        %v1202 = vunpack.c.l.b16 %v1163
        %v1203 = vunpack.c.l.b16 %v1164
        %v1204 = vunpack.c.l.b16 %v1165
        %v1205 = vunpack.c.l.b16 %v1166
        %v1206 = vpack.c.b16 %v1191, %v1190
        %v1207 = vpack.c.b16 %v1193, %v1192
        %v1208 = vpack.c.b16 %v1195, %v1194
        %v1209 = vpack.c.b16 %v1197, %v1196
        %v1210 = vpack.c.b16 %v1199, %v1198
        %v1211 = vpack.c.b16 %v1201, %v1200
        %v1212 = vpack.c.b16 %v1203, %v1202
        %v1213 = vpack.c.b16 %v1205, %v1204
        %1222 = vmatprep.subr.bf16.mxu0 0
        %1223 = vmatpush1.bf16.msra.mxu0 %v1213
        %1224 = vmatprep.subr.bf16.mxu0 0
        %1225 = vmatpush1.bf16.msra.mxu0 %v1212
        %1226 = vmatprep.subr.bf16.mxu0 0
        %1227 = vmatpush1.bf16.msra.mxu0 %v1211
        %1228 = vmatprep.subr.bf16.mxu0 0
        %1229 = vmatpush1.bf16.msra.mxu0 %v1210
        %1230 = vmatprep.subr.bf16.mxu0 0
        %1231 = vmatpush1.bf16.msra.mxu0 %v1209
        %1232 = vmatprep.subr.bf16.mxu0 0
        %1233 = vmatpush1.bf16.msra.mxu0 %v1208
        %1234 = vmatprep.subr.bf16.mxu0 0
        %1235 = vmatpush1.bf16.msra.mxu0 %v1207
        %1236 = vmatprep.subr.bf16.mxu0 0
        %1237 = vmatpush1.bf16.msra.mxu0 %v1206
        %1238 = vmatprep.subr.bf16.mxu0 0
        %1239 = vmatpush2.bf16.msra.mxu0 0
        %1240 = vmatprep.subr.bf16.mxu0 0
        %1241 = vmatpush2.bf16.msra.mxu0 0
        %1242 = vmatprep.subr.bf16.mxu0 0
        %1243 = vmatpush2.bf16.msra.mxu0 0
        %1244 = vmatprep.subr.bf16.mxu0 0
        %1245 = vmatpush2.bf16.msra.mxu0 0
        %1246 = vmatprep.subr.bf16.mxu0 0
        %1247 = vmatpush2.bf16.msra.mxu0 0
        %1248 = vmatprep.subr.bf16.mxu0 0
        %1249 = vmatpush2.bf16.msra.mxu0 0
        %1250 = vmatprep.subr.bf16.mxu0 0
        %1251 = vmatpush2.bf16.msra.mxu0 0
        %1252 = vmatprep.subr.bf16.mxu0 0
        %1253 = vmatpush2.bf16.msra.mxu0 0
        %1254 = vmatprep.mubr.bf16.mxu0 0
        %1255 = vmatmul.mubr.bf16.gmra.mxu0 %v1143
        %v1256 = vpop.f32.mrf.mxu0
        %v1257 = vadd.f32 %v1172, %v1256
        %v1258 = vpop.f32.mrf.mxu0
        %v1259 = vpop.f32.mrf.mxu0
        %v1260 = vadd.f32 %v1172, %v1259
        %v1261 = vpop.f32.mrf.mxu0
        %1262 = vmatprep.mubr.bf16.mxu0 0
        %1263 = vmatmul.mubr.bf16.gmra.mxu0 %v1144
        %v1264 = vpop.f32.mrf.mxu0
        %v1265 = vadd.f32 %v1172, %v1264
        %v1266 = vpop.f32.mrf.mxu0
        %v1267 = vpop.f32.mrf.mxu0
        %v1268 = vadd.f32 %v1172, %v1267
        %v1269 = vpop.f32.mrf.mxu0
        %1270 = vmatprep.mubr.bf16.mxu0 0
        %1271 = vmatmul.mubr.bf16.gmra.mxu0 %v1145
        %v1272 = vpop.f32.mrf.mxu0
        %v1273 = vadd.f32 %v1172, %v1272
        %v1274 = vpop.f32.mrf.mxu0
        %v1275 = vpop.f32.mrf.mxu0
        %v1276 = vadd.f32 %v1172, %v1275
        %v1277 = vpop.f32.mrf.mxu0
        %1278 = vmatprep.mubr.bf16.mxu0 0
        %1279 = vmatmul.mubr.bf16.gmra.mxu0 %v1146
        %v1280 = vpop.f32.mrf.mxu0
        %v1281 = vadd.f32 %v1172, %v1280
        %v1282 = vpop.f32.mrf.mxu0
        %v1283 = vpop.f32.mrf.mxu0
        %v1284 = vadd.f32 %v1172, %v1283
        %v1285 = vpop.f32.mrf.mxu0
        %1286 = vmatprep.mubr.bf16.mxu0 0
        %1287 = vmatmul.mubr.bf16.gmra.mxu0 %v1147
        %v1288 = vpop.f32.mrf.mxu0
        %v1289 = vadd.f32 %v1172, %v1288
        %v1290 = vpop.f32.mrf.mxu0
        %v1291 = vpop.f32.mrf.mxu0
        %v1292 = vadd.f32 %v1172, %v1291
        %v1293 = vpop.f32.mrf.mxu0
        %1294 = vmatprep.mubr.bf16.mxu0 0
        %1295 = vmatmul.mubr.bf16.gmra.mxu0 %v1148
        %v1296 = vpop.f32.mrf.mxu0
        %v1297 = vadd.f32 %v1172, %v1296
        %v1298 = vpop.f32.mrf.mxu0
        %v1299 = vpop.f32.mrf.mxu0
        %v1300 = vadd.f32 %v1172, %v1299
        %v1301 = vpop.f32.mrf.mxu0
        %1302 = vmatprep.mubr.bf16.mxu0 0
        %1303 = vmatmul.mubr.bf16.gmra.mxu0 %v1149
        %v1304 = vpop.f32.mrf.mxu0
        %v1305 = vadd.f32 %v1172, %v1304
        %v1306 = vpop.f32.mrf.mxu0
        %v1307 = vpop.f32.mrf.mxu0
        %v1308 = vadd.f32 %v1172, %v1307
        %v1309 = vpop.f32.mrf.mxu0
        %1310 = vmatprep.mubr.bf16.mxu0 0
        %1311 = vmatmul.mubr.bf16.gmra.mxu0 %v1150
        %v1312 = vpop.f32.mrf.mxu0
        %v1313 = vadd.f32 %v1172, %v1312
        %v1314 = vpop.f32.mrf.mxu0
        %v1315 = vpop.f32.mrf.mxu0
        %v1316 = vadd.f32 %v1172, %v1315
        %v1317 = vpop.f32.mrf.mxu0
        %1318 = vdwg.mxu0
        %v1319 = vtanh.pop %v1257
        %v1320 = vtanh.pop %v1260
        %v1321 = vtanh.pop %v1265
        %v1322 = vtanh.pop %v1268
        %v1323 = vtanh.pop %v1273
        %v1324 = vtanh.pop %v1276
        %v1325 = vtanh.pop %v1281
        %v1326 = vtanh.pop %v1284
        %v1327 = vtanh.pop %v1289
        %v1328 = vtanh.pop %v1292
        %v1329 = vtanh.pop %v1297
        %v1330 = vtanh.pop %v1300
        %v1331 = vtanh.pop %v1305
        %v1332 = vtanh.pop %v1308
        %v1333 = vtanh.pop %v1313
        %v1334 = vtanh.pop %v1316
        %v1335 = vpack.c.bf16 %v1320, %v1319
        %v1336 = vpack.c.bf16 %v1322, %v1321
        %v1337 = vpack.c.bf16 %v1324, %v1323
        %v1338 = vpack.c.bf16 %v1326, %v1325
        %v1339 = vpack.c.bf16 %v1328, %v1327
        %v1340 = vpack.c.bf16 %v1330, %v1329
        %v1341 = vpack.c.bf16 %v1332, %v1331
        %v1342 = vpack.c.bf16 %v1334, %v1333
        %v1343 = vld [vmem:[#allocation5] sm:$0xf]
        %v1344 = vld [vmem:[#allocation5 + $0x4] sm:$0xf]
        %v1345 = vld [vmem:[#allocation5 + $0x8] sm:$0xf]
        %v1346 = vld [vmem:[#allocation5 + $0xc] sm:$0xf]
        %v1347 = vld [vmem:[#allocation5 + $0x10] sm:$0xf]
        %v1348 = vld [vmem:[#allocation5 + $0x14] sm:$0xf]
        %v1349 = vld [vmem:[#allocation5 + $0x18] sm:$0xf]
        %v1350 = vld [vmem:[#allocation5 + $0x1c] sm:$0xf]
        %v1351 = vld [vmem:[#allocation5 + $0x20] sm:$0xf]
        %v1352 = vld [vmem:[#allocation5 + $0x24] sm:$0xf]
        %v1353 = vld [vmem:[#allocation5 + $0x28] sm:$0xf]
        %v1354 = vld [vmem:[#allocation5 + $0x2c] sm:$0xf]
        %v1355 = vld [vmem:[#allocation5 + $0x30] sm:$0xf]
        %v1356 = vld [vmem:[#allocation5 + $0x34] sm:$0xf]
        %v1357 = vld [vmem:[#allocation5 + $0x38] sm:$0xf]
        %v1358 = vld [vmem:[#allocation5 + $0x3c] sm:$0xf]
        %v1359 = vld [vmem:[%s10] sm:$0x1]
        %v1361 = vlaneseq
        %v1362 = vshrl.u32 %v1361, 7
        %v1363 = vsub.s32 0, %v1362
        %v1364 = vrot.slane %v1359, %v1363
        %v1382 = vunpack.c.l.b16 %v1343
        %v1383 = vunpack.c.l.b16 %v1344
        %v1384 = vunpack.c.l.b16 %v1345
        %v1385 = vunpack.c.l.b16 %v1346
        %v1386 = vunpack.c.l.b16 %v1347
        %v1387 = vunpack.c.l.b16 %v1348
        %v1388 = vunpack.c.l.b16 %v1349
        %v1389 = vunpack.c.l.b16 %v1350
        %v1390 = vunpack.c.l.b16 %v1351
        %v1391 = vunpack.c.l.b16 %v1352
        %v1392 = vunpack.c.l.b16 %v1353
        %v1393 = vunpack.c.l.b16 %v1354
        %v1394 = vunpack.c.l.b16 %v1355
        %v1395 = vunpack.c.l.b16 %v1356
        %v1396 = vunpack.c.l.b16 %v1357
        %v1397 = vunpack.c.l.b16 %v1358
        %v1398 = vpack.c.b16 %v1383, %v1382
        %v1399 = vpack.c.b16 %v1385, %v1384
        %v1400 = vpack.c.b16 %v1387, %v1386
        %v1401 = vpack.c.b16 %v1389, %v1388
        %v1402 = vpack.c.b16 %v1391, %v1390
        %v1403 = vpack.c.b16 %v1393, %v1392
        %v1404 = vpack.c.b16 %v1395, %v1394
        %v1405 = vpack.c.b16 %v1397, %v1396
        %1414 = vmatprep.subr.bf16.mxu0 0
        %1415 = vmatpush1.bf16.msra.mxu0 %v1405
        %1416 = vmatprep.subr.bf16.mxu0 0
        %1417 = vmatpush1.bf16.msra.mxu0 %v1404
        %1418 = vmatprep.subr.bf16.mxu0 0
        %1419 = vmatpush1.bf16.msra.mxu0 %v1403
        %1420 = vmatprep.subr.bf16.mxu0 0
        %1421 = vmatpush1.bf16.msra.mxu0 %v1402
        %1422 = vmatprep.subr.bf16.mxu0 0
        %1423 = vmatpush1.bf16.msra.mxu0 %v1401
        %1424 = vmatprep.subr.bf16.mxu0 0
        %1425 = vmatpush1.bf16.msra.mxu0 %v1400
        %1426 = vmatprep.subr.bf16.mxu0 0
        %1427 = vmatpush1.bf16.msra.mxu0 %v1399
        %1428 = vmatprep.subr.bf16.mxu0 0
        %1429 = vmatpush1.bf16.msra.mxu0 %v1398
        %1430 = vmatprep.subr.bf16.mxu0 0
        %1431 = vmatpush2.bf16.msra.mxu0 0
        %1432 = vmatprep.subr.bf16.mxu0 0
        %1433 = vmatpush2.bf16.msra.mxu0 0
        %1434 = vmatprep.subr.bf16.mxu0 0
        %1435 = vmatpush2.bf16.msra.mxu0 0
        %1436 = vmatprep.subr.bf16.mxu0 0
        %1437 = vmatpush2.bf16.msra.mxu0 0
        %1438 = vmatprep.subr.bf16.mxu0 0
        %1439 = vmatpush2.bf16.msra.mxu0 0
        %1440 = vmatprep.subr.bf16.mxu0 0
        %1441 = vmatpush2.bf16.msra.mxu0 0
        %1442 = vmatprep.subr.bf16.mxu0 0
        %1443 = vmatpush2.bf16.msra.mxu0 0
        %1444 = vmatprep.subr.bf16.mxu0 0
        %1445 = vmatpush2.bf16.msra.mxu0 0
        %1446 = vmatprep.mubr.bf16.mxu0 0
        %1447 = vmatmul.mubr.bf16.gmra.mxu0 %v1335
        %v1448 = vpop.f32.mrf.mxu0
        %v1449 = vadd.f32 %v1364, %v1448
        %v1450 = vpop.f32.mrf.mxu0
        %v1451 = vpop.f32.mrf.mxu0
        %v1452 = vadd.f32 %v1364, %v1451
        %v1453 = vpop.f32.mrf.mxu0
        %1454 = vmatprep.mubr.bf16.mxu0 0
        %1455 = vmatmul.mubr.bf16.gmra.mxu0 %v1336
        %v1456 = vpop.f32.mrf.mxu0
        %v1457 = vadd.f32 %v1364, %v1456
        %v1458 = vpop.f32.mrf.mxu0
        %v1459 = vpop.f32.mrf.mxu0
        %v1460 = vadd.f32 %v1364, %v1459
        %v1461 = vpop.f32.mrf.mxu0
        %1462 = vmatprep.mubr.bf16.mxu0 0
        %1463 = vmatmul.mubr.bf16.gmra.mxu0 %v1337
        %v1464 = vpop.f32.mrf.mxu0
        %v1465 = vadd.f32 %v1364, %v1464
        %v1466 = vpop.f32.mrf.mxu0
        %v1467 = vpop.f32.mrf.mxu0
        %v1468 = vadd.f32 %v1364, %v1467
        %v1469 = vpop.f32.mrf.mxu0
        %1470 = vmatprep.mubr.bf16.mxu0 0
        %1471 = vmatmul.mubr.bf16.gmra.mxu0 %v1338
        %v1472 = vpop.f32.mrf.mxu0
        %v1473 = vadd.f32 %v1364, %v1472
        %v1474 = vpop.f32.mrf.mxu0
        %v1475 = vpop.f32.mrf.mxu0
        %v1476 = vadd.f32 %v1364, %v1475
        %v1477 = vpop.f32.mrf.mxu0
        %1478 = vmatprep.mubr.bf16.mxu0 0
        %1479 = vmatmul.mubr.bf16.gmra.mxu0 %v1339
        %v1480 = vpop.f32.mrf.mxu0
        %v1481 = vadd.f32 %v1364, %v1480
        %v1482 = vpop.f32.mrf.mxu0
        %v1483 = vpop.f32.mrf.mxu0
        %v1484 = vadd.f32 %v1364, %v1483
        %v1485 = vpop.f32.mrf.mxu0
        %1486 = vmatprep.mubr.bf16.mxu0 0
        %1487 = vmatmul.mubr.bf16.gmra.mxu0 %v1340
        %v1488 = vpop.f32.mrf.mxu0
        %v1489 = vadd.f32 %v1364, %v1488
        %v1490 = vpop.f32.mrf.mxu0
        %v1491 = vpop.f32.mrf.mxu0
        %v1492 = vadd.f32 %v1364, %v1491
        %v1493 = vpop.f32.mrf.mxu0
        %1494 = vmatprep.mubr.bf16.mxu0 0
        %1495 = vmatmul.mubr.bf16.gmra.mxu0 %v1341
        %v1496 = vpop.f32.mrf.mxu0
        %v1497 = vadd.f32 %v1364, %v1496
        %v1498 = vpop.f32.mrf.mxu0
        %v1499 = vpop.f32.mrf.mxu0
        %v1500 = vadd.f32 %v1364, %v1499
        %v1501 = vpop.f32.mrf.mxu0
        %1502 = vmatprep.mubr.bf16.mxu0 0
        %1503 = vmatmul.mubr.bf16.gmra.mxu0 %v1342
        %v1504 = vpop.f32.mrf.mxu0
        %v1505 = vadd.f32 %v1364, %v1504
        %v1506 = vpop.f32.mrf.mxu0
        %v1507 = vpop.f32.mrf.mxu0
        %v1508 = vadd.f32 %v1364, %v1507
        %v1509 = vpop.f32.mrf.mxu0
        %1510 = vdwg.mxu0
        %v1511 = vtanh.pop %v1449
        %v1512 = vtanh.pop %v1452
        %v1513 = vtanh.pop %v1457
        %v1514 = vtanh.pop %v1460
        %v1515 = vtanh.pop %v1465
        %v1516 = vtanh.pop %v1468
        %v1517 = vtanh.pop %v1473
        %v1518 = vtanh.pop %v1476
        %v1519 = vtanh.pop %v1481
        %v1520 = vtanh.pop %v1484
        %v1521 = vtanh.pop %v1489
        %v1522 = vtanh.pop %v1492
        %v1523 = vtanh.pop %v1497
        %v1524 = vtanh.pop %v1500
        %v1525 = vtanh.pop %v1505
        %v1526 = vtanh.pop %v1508
        %v1527 = vpack.c.bf16 %v1512, %v1511
        %v1528 = vpack.c.bf16 %v1514, %v1513
        %v1529 = vpack.c.bf16 %v1516, %v1515
        %v1530 = vpack.c.bf16 %v1518, %v1517
        %v1531 = vpack.c.bf16 %v1520, %v1519
        %v1532 = vpack.c.bf16 %v1522, %v1521
        %v1533 = vpack.c.bf16 %v1524, %v1523
        %v1534 = vpack.c.bf16 %v1526, %v1525
        %v1535 = vld [vmem:[#allocation7] sm:$0xf]
        %v1536 = vld [vmem:[#allocation7 + $0x4] sm:$0xf]
        %v1537 = vld [vmem:[#allocation7 + $0x8] sm:$0xf]
        %v1538 = vld [vmem:[#allocation7 + $0xc] sm:$0xf]
        %v1539 = vld [vmem:[#allocation7 + $0x10] sm:$0xf]
        %v1540 = vld [vmem:[#allocation7 + $0x14] sm:$0xf]
        %v1541 = vld [vmem:[#allocation7 + $0x18] sm:$0xf]
        %v1542 = vld [vmem:[#allocation7 + $0x1c] sm:$0xf]
        %v1543 = vld [vmem:[#allocation7 + $0x20] sm:$0xf]
        %v1544 = vld [vmem:[#allocation7 + $0x24] sm:$0xf]
        %v1545 = vld [vmem:[#allocation7 + $0x28] sm:$0xf]
        %v1546 = vld [vmem:[#allocation7 + $0x2c] sm:$0xf]
        %v1547 = vld [vmem:[#allocation7 + $0x30] sm:$0xf]
        %v1548 = vld [vmem:[#allocation7 + $0x34] sm:$0xf]
        %v1549 = vld [vmem:[#allocation7 + $0x38] sm:$0xf]
        %v1550 = vld [vmem:[#allocation7 + $0x3c] sm:$0xf]
        %v1551 = vld [vmem:[%s12] sm:$0x1]
        %v1553 = vlaneseq
        %v1554 = vshrl.u32 %v1553, 7
        %v1555 = vsub.s32 0, %v1554
        %v1556 = vrot.slane %v1551, %v1555
        %v1574 = vunpack.c.l.b16 %v1535
        %v1575 = vunpack.c.l.b16 %v1536
        %v1576 = vunpack.c.l.b16 %v1537
        %v1577 = vunpack.c.l.b16 %v1538
        %v1578 = vunpack.c.l.b16 %v1539
        %v1579 = vunpack.c.l.b16 %v1540
        %v1580 = vunpack.c.l.b16 %v1541
        %v1581 = vunpack.c.l.b16 %v1542
        %v1582 = vunpack.c.l.b16 %v1543
        %v1583 = vunpack.c.l.b16 %v1544
        %v1584 = vunpack.c.l.b16 %v1545
        %v1585 = vunpack.c.l.b16 %v1546
        %v1586 = vunpack.c.l.b16 %v1547
        %v1587 = vunpack.c.l.b16 %v1548
        %v1588 = vunpack.c.l.b16 %v1549
        %v1589 = vunpack.c.l.b16 %v1550
        %v1590 = vpack.c.b16 %v1575, %v1574
        %v1591 = vpack.c.b16 %v1577, %v1576
        %v1592 = vpack.c.b16 %v1579, %v1578
        %v1593 = vpack.c.b16 %v1581, %v1580
        %v1594 = vpack.c.b16 %v1583, %v1582
        %v1595 = vpack.c.b16 %v1585, %v1584
        %v1596 = vpack.c.b16 %v1587, %v1586
        %v1597 = vpack.c.b16 %v1589, %v1588
        %1606 = vmatprep.subr.bf16.mxu0 0
        %1607 = vmatpush1.bf16.msra.mxu0 %v1597
        %1608 = vmatprep.subr.bf16.mxu0 0
        %1609 = vmatpush1.bf16.msra.mxu0 %v1596
        %1610 = vmatprep.subr.bf16.mxu0 0
        %1611 = vmatpush1.bf16.msra.mxu0 %v1595
        %1612 = vmatprep.subr.bf16.mxu0 0
        %1613 = vmatpush1.bf16.msra.mxu0 %v1594
        %1614 = vmatprep.subr.bf16.mxu0 0
        %1615 = vmatpush1.bf16.msra.mxu0 %v1593
        %1616 = vmatprep.subr.bf16.mxu0 0
        %1617 = vmatpush1.bf16.msra.mxu0 %v1592
        %1618 = vmatprep.subr.bf16.mxu0 0
        %1619 = vmatpush1.bf16.msra.mxu0 %v1591
        %1620 = vmatprep.subr.bf16.mxu0 0
        %1621 = vmatpush1.bf16.msra.mxu0 %v1590
        %1622 = vmatprep.subr.bf16.mxu0 0
        %1623 = vmatpush2.bf16.msra.mxu0 0
        %1624 = vmatprep.subr.bf16.mxu0 0
        %1625 = vmatpush2.bf16.msra.mxu0 0
        %1626 = vmatprep.subr.bf16.mxu0 0
        %1627 = vmatpush2.bf16.msra.mxu0 0
        %1628 = vmatprep.subr.bf16.mxu0 0
        %1629 = vmatpush2.bf16.msra.mxu0 0
        %1630 = vmatprep.subr.bf16.mxu0 0
        %1631 = vmatpush2.bf16.msra.mxu0 0
        %1632 = vmatprep.subr.bf16.mxu0 0
        %1633 = vmatpush2.bf16.msra.mxu0 0
        %1634 = vmatprep.subr.bf16.mxu0 0
        %1635 = vmatpush2.bf16.msra.mxu0 0
        %1636 = vmatprep.subr.bf16.mxu0 0
        %1637 = vmatpush2.bf16.msra.mxu0 0
        %1638 = vmatprep.mubr.bf16.mxu0 0
        %1639 = vmatmul.mubr.bf16.gmra.mxu0 %v1527
        %v1640 = vpop.f32.mrf.mxu0
        %v1641 = vadd.f32 %v1556, %v1640
        %v1642 = vpop.f32.mrf.mxu0
        %v1643 = vpop.f32.mrf.mxu0
        %v1644 = vadd.f32 %v1556, %v1643
        %v1645 = vpop.f32.mrf.mxu0
        %1646 = vmatprep.mubr.bf16.mxu0 0
        %1647 = vmatmul.mubr.bf16.gmra.mxu0 %v1528
        %v1648 = vpop.f32.mrf.mxu0
        %v1649 = vadd.f32 %v1556, %v1648
        %v1650 = vpop.f32.mrf.mxu0
        %v1651 = vpop.f32.mrf.mxu0
        %v1652 = vadd.f32 %v1556, %v1651
        %v1653 = vpop.f32.mrf.mxu0
        %1654 = vmatprep.mubr.bf16.mxu0 0
        %1655 = vmatmul.mubr.bf16.gmra.mxu0 %v1529
        %v1656 = vpop.f32.mrf.mxu0
        %v1657 = vadd.f32 %v1556, %v1656
        %v1658 = vpop.f32.mrf.mxu0
        %v1659 = vpop.f32.mrf.mxu0
        %v1660 = vadd.f32 %v1556, %v1659
        %v1661 = vpop.f32.mrf.mxu0
        %1662 = vmatprep.mubr.bf16.mxu0 0
        %1663 = vmatmul.mubr.bf16.gmra.mxu0 %v1530
        %v1664 = vpop.f32.mrf.mxu0
        %v1665 = vadd.f32 %v1556, %v1664
        %v1666 = vpop.f32.mrf.mxu0
        %v1667 = vpop.f32.mrf.mxu0
        %v1668 = vadd.f32 %v1556, %v1667
        %v1669 = vpop.f32.mrf.mxu0
        %1670 = vmatprep.mubr.bf16.mxu0 0
        %1671 = vmatmul.mubr.bf16.gmra.mxu0 %v1531
        %v1672 = vpop.f32.mrf.mxu0
        %v1673 = vadd.f32 %v1556, %v1672
        %v1674 = vpop.f32.mrf.mxu0
        %v1675 = vpop.f32.mrf.mxu0
        %v1676 = vadd.f32 %v1556, %v1675
        %v1677 = vpop.f32.mrf.mxu0
        %1678 = vmatprep.mubr.bf16.mxu0 0
        %1679 = vmatmul.mubr.bf16.gmra.mxu0 %v1532
        %v1680 = vpop.f32.mrf.mxu0
        %v1681 = vadd.f32 %v1556, %v1680
        %v1682 = vpop.f32.mrf.mxu0
        %v1683 = vpop.f32.mrf.mxu0
        %v1684 = vadd.f32 %v1556, %v1683
        %v1685 = vpop.f32.mrf.mxu0
        %1686 = vmatprep.mubr.bf16.mxu0 0
        %1687 = vmatmul.mubr.bf16.gmra.mxu0 %v1533
        %v1688 = vpop.f32.mrf.mxu0
        %v1689 = vadd.f32 %v1556, %v1688
        %v1690 = vpop.f32.mrf.mxu0
        %v1691 = vpop.f32.mrf.mxu0
        %v1692 = vadd.f32 %v1556, %v1691
        %v1693 = vpop.f32.mrf.mxu0
        %1694 = vmatprep.mubr.bf16.mxu0 0
        %1695 = vmatmul.mubr.bf16.gmra.mxu0 %v1534
        %v1696 = vpop.f32.mrf.mxu0
        %v1697 = vadd.f32 %v1556, %v1696
        %v1698 = vpop.f32.mrf.mxu0
        %v1699 = vpop.f32.mrf.mxu0
        %v1700 = vadd.f32 %v1556, %v1699
        %v1701 = vpop.f32.mrf.mxu0
        %1702 = vdwg.mxu0
        %1703 = vst [vmem:[%s509] sm:$0xff] %v1641
        %1704 = vst [vmem:[%s509 + $0x8] sm:$0xff] %v1644
        %1705 = vst [vmem:[%s509 + $0x10] sm:$0xff] %v1649
        %1706 = vst [vmem:[%s509 + $0x18] sm:$0xff] %v1652
        %1707 = vst [vmem:[%s509 + $0x20] sm:$0xff] %v1657
        %1708 = vst [vmem:[%s509 + $0x28] sm:$0xff] %v1660
        %1709 = vst [vmem:[%s509 + $0x30] sm:$0xff] %v1665
        %1710 = vst [vmem:[%s509 + $0x38] sm:$0xff] %v1668
        %1711 = vst [vmem:[%s509 + $0x40] sm:$0xff] %v1673
        %1712 = vst [vmem:[%s509 + $0x48] sm:$0xff] %v1676
        %1713 = vst [vmem:[%s509 + $0x50] sm:$0xff] %v1681
        %1714 = vst [vmem:[%s509 + $0x58] sm:$0xff] %v1684
        %1715 = vst [vmem:[%s509 + $0x60] sm:$0xff] %v1689
        %1716 = vst [vmem:[%s509 + $0x68] sm:$0xff] %v1692
        %1717 = vst [vmem:[%s509 + $0x70] sm:$0xff] %v1697
        %1718 = vst [vmem:[%s509 + $0x78] sm:$0xff] %v1700
        %s1719 = sand.u32 %s320, 1
        %s1720 = scalar_lea.sflag [#allocation4], %s1719
        %s1721 = sand.u32 %s320, 1
        %s1722 = smul.addr %s1721, 128
        %s1723 = scalar_lea.vmem [#allocation8], %s1722
        %s1724 = sand.u32 %s346, 1
        %s1725 = scalar_lea.sflag [#allocation10], %s1724
        %s1726 = sand.u32 %s346, 1
        %s1727 = smul.addr %s1726, 128
        %s1728 = scalar_lea.vmem [#allocation9], %s1727
        // Predicated region
        $region85: #{tpu_custom_call.1} parent=71 // pred_check
          %p1729 = pneg %p330
        $region86: #{tpu_custom_call.1} parent=71 // pred_check_branch
          %1731 = sbr.rel (%p1729) target = $region88
        $region87: #{tpu_custom_call.1} parent=71 // pred_region
          %s1732 = smul.u32 16, %s34
          %s1734 = ssub.s32 2048, 2048
          %1735 = vsyncadd %s1720, %s1734
          %s1736 = smul.addr %s1732, 128
          %s1737 = scalar_lea.hbm %s13, %s1736
          %s1738 = sshll.u32 %s1723, 4
          %s1739 = int_to_ptr.vmem [resolvable:$true] %s1738
          %1744 = dma.vmem_to_hbm [thread:$0]  %s1739, 2048, %s1737, %s1720, 128, 128, 8
        $region88: #{tpu_custom_call.1} parent=71 // pred_fallthru
          _
        // Predicated region
        $region89: #{tpu_custom_call.1} parent=71 // pred_check
          %p1745 = pneg %p356
        $region90: #{tpu_custom_call.1} parent=71 // pred_check_branch
          %1747 = sbr.rel (%p1745) target = $region92
        $region91: #{tpu_custom_call.1} parent=71 // pred_region
          %s1748 = smul.u32 16, %s34
          %s1750 = ssub.s32 2048, 2048
          %1751 = vsyncadd %s1725, %s1750
          %s1752 = smul.addr %s1748, 128
          %s1753 = scalar_lea.hbm %s14, %s1752
          %s1754 = sshll.u32 %s1728, 4
          %s1755 = int_to_ptr.vmem [resolvable:$true] %s1754
          %1760 = dma.vmem_to_hbm [thread:$0]  %s1755, 2048, %s1753, %s1725, 128, 128, 8
        $region92: #{tpu_custom_call.1} parent=71 // pred_fallthru
          _
      $region72: #{tpu_custom_call.1} parent=5 // pred_fallthru
        _
      %p1761 = scmp.le.s32.totalorder 2, %s29
      // Predicated region
      $region93: #{tpu_custom_call.1} parent=5 // pred_check
        %p1762 = pneg %p1761
      $region94: #{tpu_custom_call.1} parent=5 // pred_check_branch
        %1764 = sbr.rel (%p1762) target = $region96
      $region95: #{tpu_custom_call.1} parent=5 // pred_region
        %s1765 = ssub.s32 %s29, 2
        // Predicated region
        $region97: #{tpu_custom_call.1} parent=95 // pred_check
          %p1766 = pneg %p336
        $region98: #{tpu_custom_call.1} parent=95 // pred_check_branch
          %1768 = sbr.rel (%p1766) target = $region100
        $region99: #{tpu_custom_call.1} parent=95 // pred_region
          %s1769 = sand.u32 %s321, 1
          %s1770 = scalar_lea.sflag [#allocation4], %s1769
          %s1771 = sand.u32 %s321, 1
          %s1772 = smul.addr %s1771, 128
          %s1773 = scalar_lea.vmem [#allocation8], %s1772
          %1774 = dma.done %s1770, 2048
        $region100: #{tpu_custom_call.1} parent=95 // pred_fallthru
          _
        // Predicated region
        $region101: #{tpu_custom_call.1} parent=95 // pred_check
          %p1775 = pneg %p362
        $region102: #{tpu_custom_call.1} parent=95 // pred_check_branch
          %1777 = sbr.rel (%p1775) target = $region104
        $region103: #{tpu_custom_call.1} parent=95 // pred_region
          %s1778 = sand.u32 %s347, 1
          %s1779 = scalar_lea.sflag [#allocation10], %s1778
          %s1780 = sand.u32 %s347, 1
          %s1781 = smul.addr %s1780, 128
          %s1782 = scalar_lea.vmem [#allocation9], %s1781
          %1783 = dma.done %s1779, 2048
        $region104: #{tpu_custom_call.1} parent=95 // pred_fallthru
          _
      $region96: #{tpu_custom_call.1} parent=5 // pred_fallthru
        _
    $region6: #{tpu_custom_call.1} parent=1 // loop_footer
      %s33 = sadd.s32 1, %s29
    $region7: #{tpu_custom_call.1} parent=1 // loop_footer_branch
      %28 = sbr.rel target = $region3
    $region8: #{tpu_custom_call.1} parent=1 // loop_exit
      _
    %1784 = vsyncpa [#allocation3], 1
    %s1785 = scalar_lea.sflag [#allocation3], 1
    %1786 = vsyncpa %s1785, 1
    %1787 = vsyncpa [#allocation6], 1
    %1788 = vsyncpa [#allocation4], 1
    %s1789 = scalar_lea.sflag [#allocation4], 1
    %1790 = vsyncpa %s1789, 1
    %1791 = vsyncpa [#allocation10], 1
    %s1792 = scalar_lea.sflag [#allocation10], 1
    %1793 = vsyncpa %s1792, 1

</llo_original>
